<compile_context>
chip_gen: v7x
topology: tpu7x:2x2x1
jax: 0.10.0
libtpu: 0.0.40
codegen_flags: <defaults>
</compile_context>

<pallas_src>
import functools

import jax
import jax.numpy as jnp
from jax import lax
from jax.experimental import pallas as pl
from jax.experimental.pallas import tpu as pltpu


# ----------------------------- configs --------------------------------------
class Configs:
    pos_margin = 0.1
    neg_margin = 1.4
    max_points = 256
    safe_radius = 0.10
    matchability_radius = 0.05
    pos_radius = 0.0375


# --------------------------- fused Pallas kernel -----------------------------
def _fused_metric_kernel(corr_ref, src_all_ref, tgt_allT_ref, ov_ref, out_ref, *,
                         pos_radius2, safe_radius2, matchability_radius2,
                         pos_margin, neg_margin, log_scale,
                         pos_optimal, neg_optimal):
    k = corr_ref.shape[0]
    n = src_all_ref.shape[0]
    m = tgt_allT_ref.shape[1]
    c = src_all_ref.shape[1] - 4           # packed as [feats(C) | xyz(3) | sal(1)]
    big = jnp.float32(1e30)

    def bce(p, g):
        # torch BCELoss clamps the log terms at -100
        logp = jnp.maximum(jnp.log(p), -100.0)
        log1mp = jnp.maximum(jnp.log(1.0 - p), -100.0)
        return -(g * logp + (1.0 - g) * log1mp)

    # ---------------- in-kernel gathers via one-hot matmuls (MXU) ---------------
    corr = corr_ref[...]                   # (K, 2) int32
    idx_s = corr[:, 0:1]                   # (K, 1)
    idx_t = corr[:, 1:2]                   # (K, 1)
    onehot_s = (lax.broadcasted_iota(jnp.int32, (k, n), 1) == idx_s).astype(jnp.float32)
    onehot_t = (lax.broadcasted_iota(jnp.int32, (k, m), 1) == idx_t).astype(jnp.float32)
    # gathered src rows: (K, C+4) = [feats | xyz | saliency]
    src_sel = lax.dot_general(onehot_s, src_all_ref[...],
                              (((1,), (0,)), ((), ())),
                              preferred_element_type=jnp.float32)
    # gathered tgt rows, transposed: (C+4, K)
    tgt_selT = lax.dot_general(tgt_allT_ref[...], onehot_t,
                               (((1,), (1,)), ((), ())),
                               preferred_element_type=jnp.float32)
    src_f = src_sel[:, 0:c]                # (K, C)
    sp = src_sel[:, c:c + 3]               # (K, 3)
    sal1 = src_sel[:, c + 3:c + 4]         # (K, 1)
    tgt_fT = tgt_selT[0:c, :]              # (C, K)
    tpT = tgt_selT[c:c + 3, :]             # (3, K)
    sal2 = tgt_selT[c + 3:c + 4, :]        # (1, K)

    # ---------------- overlap weighted BCE + precision / recall ----------------
    # gt masks recovered from the one-hots (duplicate indices behave like set()).
    src_gt = jnp.max(onehot_s, axis=0, keepdims=True)    # (1, N)
    tgt_gt = jnp.max(onehot_t, axis=0, keepdims=True)    # (1, M)
    ov = ov_ref[...]                                     # (1, N+M)
    ovp_s = ov[:, 0:n]
    ovp_t = ov[:, n:n + m]
    inv_nm = 1.0 / float(n + m)
    w_neg_o = (jnp.sum(src_gt) + jnp.sum(tgt_gt)) * inv_nm
    w_pos_o = 1.0 - w_neg_o
    overlap_loss = (jnp.sum(jnp.where(src_gt >= 0.5, w_pos_o, w_neg_o) * bce(ovp_s, src_gt))
                    + jnp.sum(jnp.where(tgt_gt >= 0.5, w_pos_o, w_neg_o) * bce(ovp_t, tgt_gt))
                    ) * inv_nm
    ovl_s = (ovp_s >= 0.5).astype(jnp.float32)   # torch round(): 0.5 rounds-to-even there
    ovl_t = (ovp_t >= 0.5).astype(jnp.float32)
    tp_o = jnp.sum(ovl_s * src_gt) + jnp.sum(ovl_t * tgt_gt)
    overlap_prec = tp_o / jnp.maximum(jnp.sum(ovl_s) + jnp.sum(ovl_t), 1e-12)
    overlap_rec = tp_o / jnp.maximum(jnp.sum(src_gt) + jnp.sum(tgt_gt), 1e-12)

    # ---------------- squared coords_dist on the VPU (contraction dim = 3) ------
    cd2 = jnp.zeros((k, k), jnp.float32)
    for cc in range(3):                    # unrolled: 3 broadcast-sub + FMA passes
        diff = sp[:, cc:cc + 1] - tpT[cc:cc + 1, :]
        cd2 = cd2 + diff * diff

    # ---------------- feature scores (MXU) + derived feats_dist -----------------
    scores = lax.dot_general(src_f, tgt_fT, (((1,), (0,)), ((), ())),
                             preferred_element_type=jnp.float32)    # (K, K)
    fd = jnp.sqrt(jnp.maximum(2.0 - 2.0 * scores, 1e-12))           # normalised dist

    # ------ saliency labels: cd2 at the row/col argmax of scores (masked min) ---
    row_max = jnp.max(scores, axis=-1, keepdims=True)
    d1_sq = jnp.min(jnp.where(scores >= row_max, cd2, big), axis=-1, keepdims=True)  # (K,1)
    col_max = jnp.max(scores, axis=-2, keepdims=True)
    d2_sq = jnp.min(jnp.where(scores >= col_max, cd2, big), axis=-2, keepdims=True)  # (1,K)
    lab1 = (d1_sq < matchability_radius2).astype(jnp.float32)       # (K, 1)
    lab2 = (d2_sq < matchability_radius2).astype(jnp.float32)       # (1, K)

    # ---------------- saliency weighted BCE + precision / recall ----------------
    inv_2k = 1.0 / float(2 * k)
    gt_sum_s = jnp.sum(lab1) + jnp.sum(lab2)
    w_neg_s = gt_sum_s * inv_2k
    w_pos_s = 1.0 - w_neg_s
    saliency_loss = (jnp.sum(jnp.where(lab1 >= 0.5, w_pos_s, w_neg_s) * bce(sal1, lab1))
                     + jnp.sum(jnp.where(lab2 >= 0.5, w_pos_s, w_neg_s) * bce(sal2, lab2))
                     ) * inv_2k
    sl1 = (sal1 >= 0.5).astype(jnp.float32)
    sl2 = (sal2 >= 0.5).astype(jnp.float32)
    tp_s = jnp.sum(sl1 * lab1) + jnp.sum(sl2 * lab2)
    sal_prec = tp_s / jnp.maximum(jnp.sum(sl1) + jnp.sum(sl2), 1e-12)
    sal_rec = tp_s / jnp.maximum(gt_sum_s, 1e-12)

    # ---------------- circle loss ------------------------------------------------
    row_min_cd2 = jnp.min(cd2, axis=-1, keepdims=True)   # (K, 1)
    row_max_cd2 = jnp.max(cd2, axis=-1, keepdims=True)
    col_min_cd2 = jnp.min(cd2, axis=-2, keepdims=True)   # (1, K)
    col_max_cd2 = jnp.max(cd2, axis=-2, keepdims=True)
    row_sel = ((row_min_cd2 < pos_radius2) & (row_max_cd2 > safe_radius2)).astype(jnp.float32)
    col_sel = ((col_min_cd2 < pos_radius2) & (col_max_cd2 > safe_radius2)).astype(jnp.float32)

    # exact rewrite of torch's +-1e5 masking: outside the mask the weight is 0.
    # NOTE: torch .detach()s pos_w/neg_w/row_sel/col_sel - forward-only here.
    pos_w = jnp.where(cd2 < pos_radius2, jnp.maximum(fd - pos_optimal, 0.0), 0.0)
    neg_w = jnp.where(cd2 > safe_radius2, jnp.maximum(neg_optimal - fd, 0.0), 0.0)
    pos_logits = log_scale * (fd - pos_margin) * pos_w
    neg_logits = log_scale * (neg_margin - fd) * neg_w

    def lse(x, axis):
        mx = jnp.max(x, axis=axis, keepdims=True)
        return mx + jnp.log(jnp.sum(jnp.exp(x - mx), axis=axis, keepdims=True))

    def softplus(x):  # matches F.softplus (beta=1, threshold=20)
        return jnp.where(x > 20.0, x, jnp.log1p(jnp.exp(jnp.minimum(x, 20.0))))

    inv_ls = 1.0 / log_scale
    loss_row = softplus(lse(pos_logits, -1) + lse(neg_logits, -1)) * inv_ls   # (K, 1)
    loss_col = softplus(lse(pos_logits, -2) + lse(neg_logits, -2)) * inv_ls   # (1, K)
    # exact divisions; the max(.,1) guard yields 0 (not NaN) for an empty selection
    loss_r = jnp.sum(loss_row * row_sel) / jnp.maximum(jnp.sum(row_sel), 1.0)
    loss_c = jnp.sum(loss_col * col_sel) / jnp.maximum(jnp.sum(col_sel), 1.0)
    circle = 0.5 * (loss_r + loss_c)

    # ---------------- feature-match recall ---------------------------------------
    # argmin of feats_dist == argmax of scores, so d1_sq is already the squared
    # coords distance of each source point's feature-space nearest neighbour.
    has_pos = (row_min_cd2 < pos_radius2).astype(jnp.float32)        # (K, 1)
    n_pred = jnp.sum((d1_sq < pos_radius2).astype(jnp.float32) * has_pos)
    recall = n_pred / (jnp.sum(has_pos) + 1e-12)

    # ---------------- pack the 8 scalars into one lane row (single store) --------
    lane8 = lax.broadcasted_iota(jnp.int32, (1, 8), 1)
    out_ref[...] = (jnp.where(lane8 == 0, overlap_loss, 0.0)
                    + jnp.where(lane8 == 1, overlap_prec, 0.0)
                    + jnp.where(lane8 == 2, overlap_rec, 0.0)
                    + jnp.where(lane8 == 3, saliency_loss, 0.0)
                    + jnp.where(lane8 == 4, sal_prec, 0.0)
                    + jnp.where(lane8 == 5, sal_rec, 0.0)
                    + jnp.where(lane8 == 6, circle, 0.0)
                    + jnp.where(lane8 == 7, recall, 0.0))


def _metric_stats_pallas(corr, src_all, tgt_allT, ov_row, *,
                         pos_radius, safe_radius, matchability_radius,
                         pos_margin, neg_margin, log_scale,
                         pos_optimal, neg_optimal):
    k = corr.shape[0]
    n, c4 = src_all.shape
    m = tgt_allT.shape[1]
    nm = ov_row.shape[1]
    kern = functools.partial(
        _fused_metric_kernel,
        pos_radius2=float(pos_radius) ** 2,
        safe_radius2=float(safe_radius) ** 2,
        matchability_radius2=float(matchability_radius) ** 2,
        pos_margin=float(pos_margin), neg_margin=float(neg_margin),
        log_scale=float(log_scale), pos_optimal=float(pos_optimal),
        neg_optimal=float(neg_optimal))
    out = pl.pallas_call(
        kern,
        out_shape=jax.ShapeDtypeStruct((1, 8), jnp.float32),
        grid=(1,),
        in_specs=[
            pl.BlockSpec((k, 2), lambda i: (0, 0)),       # correspondence indices
            pl.BlockSpec((n, c4), lambda i: (0, 0)),      # src [feats|xyz|sal]
            pl.BlockSpec((c4, m), lambda i: (0, 0)),      # tgt [feats|xyz|sal]^T
            pl.BlockSpec((1, nm), lambda i: (0, 0)),      # overlap predictions
        ],
        out_specs=pl.BlockSpec((1, 8), lambda i: (0, 0)),
        compiler_params=pltpu.CompilerParams(
            dimension_semantics=("arbitrary",)),
    )(corr.astype(jnp.int32), src_all.astype(jnp.float32),
      tgt_allT.astype(jnp.float32), ov_row.astype(jnp.float32))
    return out[0]


# --------------------------- module wrapper ----------------------------------
class MetricLossPallas:
    def __init__(self, configs, log_scale=16, pos_optimal=0.1, neg_optimal=1.4):
        self.log_scale = log_scale
        self.pos_optimal = pos_optimal
        self.neg_optimal = neg_optimal
        self.pos_margin = configs.pos_margin
        self.neg_margin = configs.neg_margin
        self.max_points = configs.max_points
        self.safe_radius = configs.safe_radius
        self.matchability_radius = configs.matchability_radius
        self.pos_radius = configs.pos_radius

    def forward(self, src_pcd, tgt_pcd, src_feats, tgt_feats, correspondence,
                rot, trans, scores_overlap, scores_saliency):
        src_pcd = (rot @ src_pcd.T + trans).T
        N = src_pcd.shape[0]
        M = tgt_pcd.shape[0]

        # TODO(synk): torch dedups indices via python set(); synthetic correspondences
        #             use unique indices so the dedup is a no-op (the in-kernel one-hot
        #             max handles duplicates for the overlap gt anyway).
        # TODO(synk): the data-dependent filtering (c_dist < pos_radius - 0.001) and
        #             random subsampling to max_points are dynamic-shape ops with no
        #             static-shape Pallas equivalent; synthetic data is built so every
        #             correspondence passes and K <= max_points.
        src_all = jnp.concatenate(
            [src_feats, src_pcd, scores_saliency[:N].reshape(N, 1)], axis=1)
        tgt_allT = jnp.concatenate(
            [tgt_feats, tgt_pcd, scores_saliency[N:].reshape(M, 1)], axis=1).T

        s = _metric_stats_pallas(
            correspondence, src_all, tgt_allT,
            scores_overlap.reshape(1, N + M),
            pos_radius=self.pos_radius, safe_radius=self.safe_radius,
            matchability_radius=self.matchability_radius,
            pos_margin=self.pos_margin, neg_margin=self.neg_margin,
            log_scale=self.log_scale, pos_optimal=self.pos_optimal,
            neg_optimal=self.neg_optimal)

        return {
            "overlap_loss": s[0],
            "overlap_precision": s[1],
            "overlap_recall": s[2],
            "saliency_loss": s[3],
            "saliency_precision": s[4],
            "saliency_recall": s[5],
            "circle_loss": s[6],
            "recall": s[7],
        }


# ------------------------------- main ----------------------------------------
if __name__ == "__main__":
    cfg = Configs()
    N, M, C, K = 64, 64, 32, 32

    key = jax.random.PRNGKey(0)
    k1, k2, k3, k4, k5, k6, k7, k8 = jax.random.split(key, 8)

    src_pcd = jax.random.uniform(k1, (N, 3), jnp.float32)

    theta = 0.5
    c, s = jnp.cos(theta), jnp.sin(theta)
    rot = jnp.array([[c, -s, 0.0], [s, c, 0.0], [0.0, 0.0, 1.0]], jnp.float32)
    trans = jnp.array([[0.1], [0.2], [0.3]], jnp.float32)

    src_idx = jnp.arange(K, dtype=jnp.int32)
    tgt_idx = jax.random.permutation(k2, K).astype(jnp.int32)
    correspondence = jnp.stack([src_idx, tgt_idx], axis=1)

    src_xformed = (rot @ src_pcd.T + trans).T
    tgt_pcd = jax.random.uniform(k3, (M, 3), jnp.float32)
    noise = 0.002 * jax.random.normal(k4, (K, 3), jnp.float32)
    tgt_pcd = tgt_pcd.at[tgt_idx].set(src_xformed[src_idx] + noise)

    src_feats = jax.random.normal(k5, (N, C), jnp.float32)
    src_feats = src_feats / jnp.linalg.norm(src_feats, axis=1, keepdims=True)
    tgt_feats = jax.random.normal(k6, (M, C), jnp.float32)
    tgt_feats = tgt_feats / jnp.linalg.norm(tgt_feats, axis=1, keepdims=True)

    scores_overlap = jax.nn.sigmoid(jax.random.normal(k7, (N + M,), jnp.float32))
    scores_saliency = jax.nn.sigmoid(jax.random.normal(k8, (N + M,), jnp.float32))

    loss_mod = MetricLossPallas(cfg)
    forward_jit = jax.jit(loss_mod.forward)   # single dispatch: glue + one kernel
    stats = forward_jit(src_pcd, tgt_pcd, src_feats, tgt_feats, correspondence,
                        rot, trans, scores_overlap, scores_saliency)
    stats = {k_: jax.block_until_ready(v) for k_, v in stats.items()}
    print("KERNEL_OK")
</pallas_src>

<mosaic_0001>
module attributes {stable_mosaic.version = 11 : i64} {
  func.func @_fused_metric_kernel(%arg0: i32, %arg1: memref<32x2xi32, #tpu.memory_space<vmem>>, %arg2: memref<64x36xf32, #tpu.memory_space<vmem>>, %arg3: memref<36x64xf32, #tpu.memory_space<vmem>>, %arg4: memref<1x128xf32, #tpu.memory_space<vmem>>, %arg5: memref<1x8xf32, #tpu.memory_space<vmem>>) attributes {dimension_semantics = [#tpu.dimension_semantics<arbitrary>], iteration_bounds = array<i64: 1>, scalar_prefetch = 0 : i64, scratch_operands = 0 : i64, tpu.core_type = #tpu.core_type<tc>, window_params = [{pipeline_mode = #tpu.pipeline_mode<synchronous>, transform_indices = @transform_0, window_bounds = array<i64: 32, 2>}, {pipeline_mode = #tpu.pipeline_mode<synchronous>, transform_indices = @transform_1, window_bounds = array<i64: 64, 36>}, {pipeline_mode = #tpu.pipeline_mode<synchronous>, transform_indices = @transform_2, window_bounds = array<i64: 36, 64>}, {pipeline_mode = #tpu.pipeline_mode<synchronous>, transform_indices = @transform_3, window_bounds = array<i64: 1, 128>}, {pipeline_mode = #tpu.pipeline_mode<synchronous>, transform_indices = @transform_4, window_bounds = array<i64: 1, 8>}]} {
    %c0 = arith.constant 0 : index
    %c0_0 = arith.constant 0 : index
    %0 = vector.load %arg1[%c0, %c0_0] : memref<32x2xi32, #tpu.memory_space<vmem>>, vector<32x2xi32>
    %1 = vector.extract_strided_slice %0 {offsets = [0, 0], sizes = [32, 1], strides = [1, 1]} : vector<32x2xi32> to vector<32x1xi32>
    %2 = vector.extract_strided_slice %0 {offsets = [0, 1], sizes = [32, 1], strides = [1, 1]} : vector<32x2xi32> to vector<32x1xi32>
    %3 = tpu.iota {dimensions = array<i32: 1>} : vector<32x64xi32>
    %4 = vector.broadcast %1 : vector<32x1xi32> to vector<32x64xi32>
    %5 = arith.cmpi eq, %3, %4 : vector<32x64xi32>
    %6 = arith.extui %5 : vector<32x64xi1> to vector<32x64xi32>
    %7 = arith.sitofp %6 : vector<32x64xi32> to vector<32x64xf32>
    %8 = tpu.iota {dimensions = array<i32: 1>} : vector<32x64xi32>
    %9 = vector.broadcast %2 : vector<32x1xi32> to vector<32x64xi32>
    %10 = arith.cmpi eq, %8, %9 : vector<32x64xi32>
    %11 = arith.extui %10 : vector<32x64xi1> to vector<32x64xi32>
    %12 = arith.sitofp %11 : vector<32x64xi32> to vector<32x64xf32>
    %c0_1 = arith.constant 0 : index
    %c0_2 = arith.constant 0 : index
    %13 = vector.load %arg2[%c0_1, %c0_2] : memref<64x36xf32, #tpu.memory_space<vmem>>, vector<64x36xf32>
    %cst = arith.constant dense<0.000000e+00> : vector<32x36xf32>
    %14 = tpu.matmul %7, %13, %cst {dimension_numbers = #tpu.dot_dimension_numbers<[1], [0], [0], [1], [0, 0, 1, 1], [], []>} : vector<32x64xf32>, vector<64x36xf32>, vector<32x36xf32> -> vector<32x36xf32>
    %c0_3 = arith.constant 0 : index
    %c0_4 = arith.constant 0 : index
    %15 = vector.load %arg3[%c0_3, %c0_4] : memref<36x64xf32, #tpu.memory_space<vmem>>, vector<36x64xf32>
    %cst_5 = arith.constant dense<0.000000e+00> : vector<36x32xf32>
    %16 = tpu.matmul %15, %12, %cst_5 {dimension_numbers = #tpu.dot_dimension_numbers<[1], [1], [0], [0], [0, 0, 1, 0], [], []>} : vector<36x64xf32>, vector<32x64xf32>, vector<36x32xf32> -> vector<36x32xf32>
    %17 = vector.extract_strided_slice %14 {offsets = [0, 0], sizes = [32, 32], strides = [1, 1]} : vector<32x36xf32> to vector<32x32xf32>
    %18 = vector.extract_strided_slice %14 {offsets = [0, 32], sizes = [32, 3], strides = [1, 1]} : vector<32x36xf32> to vector<32x3xf32>
    %19 = vector.extract_strided_slice %14 {offsets = [0, 35], sizes = [32, 1], strides = [1, 1]} : vector<32x36xf32> to vector<32x1xf32>
    %20 = vector.extract_strided_slice %16 {offsets = [0, 0], sizes = [32, 32], strides = [1, 1]} : vector<36x32xf32> to vector<32x32xf32>
    %21 = vector.extract_strided_slice %16 {offsets = [32, 0], sizes = [3, 32], strides = [1, 1]} : vector<36x32xf32> to vector<3x32xf32>
    %22 = vector.extract_strided_slice %16 {offsets = [35, 0], sizes = [1, 32], strides = [1, 1]} : vector<36x32xf32> to vector<1x32xf32>
    %cst_6 = arith.constant dense<0xFF800000> : vector<64xf32>
    %23 = vector.multi_reduction <maximumf>, %7, %cst_6 [0] : vector<32x64xf32> to vector<64xf32>
    %24 = vector.shape_cast %23 : vector<64xf32> to vector<1x64xf32>
    %cst_7 = arith.constant dense<0xFF800000> : vector<64xf32>
    %25 = vector.multi_reduction <maximumf>, %12, %cst_7 [0] : vector<32x64xf32> to vector<64xf32>
    %26 = vector.shape_cast %25 : vector<64xf32> to vector<1x64xf32>
    %c0_8 = arith.constant 0 : index
    %c0_9 = arith.constant 0 : index
    %27 = vector.load %arg4[%c0_8, %c0_9] : memref<1x128xf32, #tpu.memory_space<vmem>>, vector<1x128xf32>
    %28 = vector.extract_strided_slice %27 {offsets = [0, 0], sizes = [1, 64], strides = [1, 1]} : vector<1x128xf32> to vector<1x64xf32>
    %29 = vector.extract_strided_slice %27 {offsets = [0, 64], sizes = [1, 64], strides = [1, 1]} : vector<1x128xf32> to vector<1x64xf32>
    %30 = vector.shape_cast %24 : vector<1x64xf32> to vector<1x1x64xf32>
    %cst_10 = arith.constant dense<0.000000e+00> : vector<1xf32>
    %31 = vector.multi_reduction <add>, %30, %cst_10 [1, 2] : vector<1x1x64xf32> to vector<1xf32>
    %32 = vector.shape_cast %31 : vector<1xf32> to vector<1x1x1xf32>
    %33 = vector.extract %32[0, 0, 0] : f32 from vector<1x1x1xf32>
    %34 = vector.shape_cast %26 : vector<1x64xf32> to vector<1x1x64xf32>
    %cst_11 = arith.constant dense<0.000000e+00> : vector<1xf32>
    %35 = vector.multi_reduction <add>, %34, %cst_11 [1, 2] : vector<1x1x64xf32> to vector<1xf32>
    %36 = vector.shape_cast %35 : vector<1xf32> to vector<1x1x1xf32>
    %37 = vector.extract %36[0, 0, 0] : f32 from vector<1x1x1xf32>
    %38 = arith.addf %33, %37 : f32
    %cst_12 = arith.constant 7.812500e-03 : f32
    %39 = arith.mulf %38, %cst_12 : f32
    %cst_13 = arith.constant 1.000000e+00 : f32
    %40 = arith.subf %cst_13, %39 : f32
    %cst_14 = arith.constant 5.000000e-01 : f32
    %41 = vector.broadcast %cst_14 : f32 to vector<1x64xf32>
    %42 = arith.cmpf oge, %24, %41 : vector<1x64xf32>
    %43 = vector.broadcast %40 : f32 to vector<1x64xf32>
    %44 = vector.broadcast %39 : f32 to vector<1x64xf32>
    %45 = arith.select %42, %43, %44 : vector<1x64xi1>, vector<1x64xf32>
    %46 = math.log %28 : vector<1x64xf32>
    %cst_15 = arith.constant -1.000000e+02 : f32
    %47 = vector.broadcast %cst_15 : f32 to vector<1x64xf32>
    %48 = arith.maximumf %46, %47 : vector<1x64xf32>
    %cst_16 = arith.constant 1.000000e+00 : f32
    %49 = vector.broadcast %cst_16 : f32 to vector<1x64xf32>
    %50 = arith.subf %49, %28 : vector<1x64xf32>
    %51 = math.log %50 : vector<1x64xf32>
    %cst_17 = arith.constant -1.000000e+02 : f32
    %52 = vector.broadcast %cst_17 : f32 to vector<1x64xf32>
    %53 = arith.maximumf %51, %52 : vector<1x64xf32>
    %54 = arith.mulf %24, %48 : vector<1x64xf32>
    %cst_18 = arith.constant 1.000000e+00 : f32
    %55 = vector.broadcast %cst_18 : f32 to vector<1x64xf32>
    %56 = arith.subf %55, %24 : vector<1x64xf32>
    %57 = arith.mulf %56, %53 : vector<1x64xf32>
    %58 = arith.addf %54, %57 : vector<1x64xf32>
    %cst_19 = arith.constant 0.000000e+00 : f32
    %59 = vector.broadcast %cst_19 : f32 to vector<1x64xf32>
    %60 = arith.subf %59, %58 : vector<1x64xf32>
    %61 = arith.mulf %45, %60 : vector<1x64xf32>
    %62 = vector.shape_cast %61 : vector<1x64xf32> to vector<1x1x64xf32>
    %cst_20 = arith.constant dense<0.000000e+00> : vector<1xf32>
    %63 = vector.multi_reduction <add>, %62, %cst_20 [1, 2] : vector<1x1x64xf32> to vector<1xf32>
    %64 = vector.shape_cast %63 : vector<1xf32> to vector<1x1x1xf32>
    %65 = vector.extract %64[0, 0, 0] : f32 from vector<1x1x1xf32>
    %cst_21 = arith.constant 5.000000e-01 : f32
    %66 = vector.broadcast %cst_21 : f32 to vector<1x64xf32>
    %67 = arith.cmpf oge, %26, %66 : vector<1x64xf32>
    %68 = vector.broadcast %40 : f32 to vector<1x64xf32>
    %69 = vector.broadcast %39 : f32 to vector<1x64xf32>
    %70 = arith.select %67, %68, %69 : vector<1x64xi1>, vector<1x64xf32>
    %71 = math.log %29 : vector<1x64xf32>
    %cst_22 = arith.constant -1.000000e+02 : f32
    %72 = vector.broadcast %cst_22 : f32 to vector<1x64xf32>
    %73 = arith.maximumf %71, %72 : vector<1x64xf32>
    %cst_23 = arith.constant 1.000000e+00 : f32
    %74 = vector.broadcast %cst_23 : f32 to vector<1x64xf32>
    %75 = arith.subf %74, %29 : vector<1x64xf32>
    %76 = math.log %75 : vector<1x64xf32>
    %cst_24 = arith.constant -1.000000e+02 : f32
    %77 = vector.broadcast %cst_24 : f32 to vector<1x64xf32>
    %78 = arith.maximumf %76, %77 : vector<1x64xf32>
    %79 = arith.mulf %26, %73 : vector<1x64xf32>
    %cst_25 = arith.constant 1.000000e+00 : f32
    %80 = vector.broadcast %cst_25 : f32 to vector<1x64xf32>
    %81 = arith.subf %80, %26 : vector<1x64xf32>
    %82 = arith.mulf %81, %78 : vector<1x64xf32>
    %83 = arith.addf %79, %82 : vector<1x64xf32>
    %cst_26 = arith.constant 0.000000e+00 : f32
    %84 = vector.broadcast %cst_26 : f32 to vector<1x64xf32>
    %85 = arith.subf %84, %83 : vector<1x64xf32>
    %86 = arith.mulf %70, %85 : vector<1x64xf32>
    %87 = vector.shape_cast %86 : vector<1x64xf32> to vector<1x1x64xf32>
    %cst_27 = arith.constant dense<0.000000e+00> : vector<1xf32>
    %88 = vector.multi_reduction <add>, %87, %cst_27 [1, 2] : vector<1x1x64xf32> to vector<1xf32>
    %89 = vector.shape_cast %88 : vector<1xf32> to vector<1x1x1xf32>
    %90 = vector.extract %89[0, 0, 0] : f32 from vector<1x1x1xf32>
    %91 = arith.addf %65, %90 : f32
    %cst_28 = arith.constant 7.812500e-03 : f32
    %92 = arith.mulf %91, %cst_28 : f32
    %cst_29 = arith.constant 5.000000e-01 : f32
    %93 = vector.broadcast %cst_29 : f32 to vector<1x64xf32>
    %94 = arith.cmpf oge, %28, %93 : vector<1x64xf32>
    %95 = arith.extui %94 : vector<1x64xi1> to vector<1x64xi32>
    %96 = arith.sitofp %95 : vector<1x64xi32> to vector<1x64xf32>
    %cst_30 = arith.constant 5.000000e-01 : f32
    %97 = vector.broadcast %cst_30 : f32 to vector<1x64xf32>
    %98 = arith.cmpf oge, %29, %97 : vector<1x64xf32>
    %99 = arith.extui %98 : vector<1x64xi1> to vector<1x64xi32>
    %100 = arith.sitofp %99 : vector<1x64xi32> to vector<1x64xf32>
    %101 = arith.mulf %96, %24 : vector<1x64xf32>
    %102 = vector.shape_cast %101 : vector<1x64xf32> to vector<1x1x64xf32>
    %cst_31 = arith.constant dense<0.000000e+00> : vector<1xf32>
    %103 = vector.multi_reduction <add>, %102, %cst_31 [1, 2] : vector<1x1x64xf32> to vector<1xf32>
    %104 = vector.shape_cast %103 : vector<1xf32> to vector<1x1x1xf32>
    %105 = vector.extract %104[0, 0, 0] : f32 from vector<1x1x1xf32>
    %106 = arith.mulf %100, %26 : vector<1x64xf32>
    %107 = vector.shape_cast %106 : vector<1x64xf32> to vector<1x1x64xf32>
    %cst_32 = arith.constant dense<0.000000e+00> : vector<1xf32>
    %108 = vector.multi_reduction <add>, %107, %cst_32 [1, 2] : vector<1x1x64xf32> to vector<1xf32>
    %109 = vector.shape_cast %108 : vector<1xf32> to vector<1x1x1xf32>
    %110 = vector.extract %109[0, 0, 0] : f32 from vector<1x1x1xf32>
    %111 = arith.addf %105, %110 : f32
    %112 = vector.shape_cast %96 : vector<1x64xf32> to vector<1x1x64xf32>
    %cst_33 = arith.constant dense<0.000000e+00> : vector<1xf32>
    %113 = vector.multi_reduction <add>, %112, %cst_33 [1, 2] : vector<1x1x64xf32> to vector<1xf32>
    %114 = vector.shape_cast %113 : vector<1xf32> to vector<1x1x1xf32>
    %115 = vector.extract %114[0, 0, 0] : f32 from vector<1x1x1xf32>
    %116 = vector.shape_cast %100 : vector<1x64xf32> to vector<1x1x64xf32>
    %cst_34 = arith.constant dense<0.000000e+00> : vector<1xf32>
    %117 = vector.multi_reduction <add>, %116, %cst_34 [1, 2] : vector<1x1x64xf32> to vector<1xf32>
    %118 = vector.shape_cast %117 : vector<1xf32> to vector<1x1x1xf32>
    %119 = vector.extract %118[0, 0, 0] : f32 from vector<1x1x1xf32>
    %120 = arith.addf %115, %119 : f32
    %cst_35 = arith.constant 9.99999996E-13 : f32
    %121 = arith.maximumf %120, %cst_35 : f32
    %122 = arith.divf %111, %121 : f32
    %123 = vector.shape_cast %24 : vector<1x64xf32> to vector<1x1x64xf32>
    %cst_36 = arith.constant dense<0.000000e+00> : vector<1xf32>
    %124 = vector.multi_reduction <add>, %123, %cst_36 [1, 2] : vector<1x1x64xf32> to vector<1xf32>
    %125 = vector.shape_cast %124 : vector<1xf32> to vector<1x1x1xf32>
    %126 = vector.extract %125[0, 0, 0] : f32 from vector<1x1x1xf32>
    %127 = vector.shape_cast %26 : vector<1x64xf32> to vector<1x1x64xf32>
    %cst_37 = arith.constant dense<0.000000e+00> : vector<1xf32>
    %128 = vector.multi_reduction <add>, %127, %cst_37 [1, 2] : vector<1x1x64xf32> to vector<1xf32>
    %129 = vector.shape_cast %128 : vector<1xf32> to vector<1x1x1xf32>
    %130 = vector.extract %129[0, 0, 0] : f32 from vector<1x1x1xf32>
    %131 = arith.addf %126, %130 : f32
    %cst_38 = arith.constant 9.99999996E-13 : f32
    %132 = arith.maximumf %131, %cst_38 : f32
    %133 = arith.divf %111, %132 : f32
    %cst_39 = arith.constant 0.000000e+00 : f32
    %134 = vector.broadcast %cst_39 : f32 to vector<32x32xf32>
    %135 = vector.extract_strided_slice %18 {offsets = [0, 0], sizes = [32, 1], strides = [1, 1]} : vector<32x3xf32> to vector<32x1xf32>
    %136 = vector.extract_strided_slice %21 {offsets = [0, 0], sizes = [1, 32], strides = [1, 1]} : vector<3x32xf32> to vector<1x32xf32>
    %137 = vector.broadcast %135 : vector<32x1xf32> to vector<32x32xf32>
    %138 = vector.broadcast %136 : vector<1x32xf32> to vector<32x32xf32>
    %139 = arith.subf %137, %138 : vector<32x32xf32>
    %140 = arith.mulf %139, %139 : vector<32x32xf32>
    %141 = arith.addf %134, %140 : vector<32x32xf32>
    %142 = vector.extract_strided_slice %18 {offsets = [0, 1], sizes = [32, 1], strides = [1, 1]} : vector<32x3xf32> to vector<32x1xf32>
    %143 = vector.extract_strided_slice %21 {offsets = [1, 0], sizes = [1, 32], strides = [1, 1]} : vector<3x32xf32> to vector<1x32xf32>
    %144 = vector.broadcast %142 : vector<32x1xf32> to vector<32x32xf32>
    %145 = vector.broadcast %143 : vector<1x32xf32> to vector<32x32xf32>
    %146 = arith.subf %144, %145 : vector<32x32xf32>
    %147 = arith.mulf %146, %146 : vector<32x32xf32>
    %148 = arith.addf %141, %147 : vector<32x32xf32>
    %149 = vector.extract_strided_slice %18 {offsets = [0, 2], sizes = [32, 1], strides = [1, 1]} : vector<32x3xf32> to vector<32x1xf32>
    %150 = vector.extract_strided_slice %21 {offsets = [2, 0], sizes = [1, 32], strides = [1, 1]} : vector<3x32xf32> to vector<1x32xf32>
    %151 = vector.broadcast %149 : vector<32x1xf32> to vector<32x32xf32>
    %152 = vector.broadcast %150 : vector<1x32xf32> to vector<32x32xf32>
    %153 = arith.subf %151, %152 : vector<32x32xf32>
    %154 = arith.mulf %153, %153 : vector<32x32xf32>
    %155 = arith.addf %148, %154 : vector<32x32xf32>
    %cst_40 = arith.constant dense<0.000000e+00> : vector<32x32xf32>
    %156 = tpu.matmul %17, %20, %cst_40 {dimension_numbers = #tpu.dot_dimension_numbers<[1], [0], [0], [1], [0, 0, 1, 1], [], []>} : vector<32x32xf32>, vector<32x32xf32>, vector<32x32xf32> -> vector<32x32xf32>
    %cst_41 = arith.constant 2.000000e+00 : f32
    %157 = vector.broadcast %cst_41 : f32 to vector<32x32xf32>
    %158 = arith.mulf %157, %156 : vector<32x32xf32>
    %cst_42 = arith.constant 2.000000e+00 : f32
    %159 = vector.broadcast %cst_42 : f32 to vector<32x32xf32>
    %160 = arith.subf %159, %158 : vector<32x32xf32>
    %cst_43 = arith.constant 9.99999996E-13 : f32
    %161 = vector.broadcast %cst_43 : f32 to vector<32x32xf32>
    %162 = arith.maximumf %160, %161 : vector<32x32xf32>
    %163 = math.sqrt %162 : vector<32x32xf32>
    %cst_44 = arith.constant dense<0xFF800000> : vector<32xf32>
    %164 = vector.multi_reduction <maximumf>, %156, %cst_44 [1] : vector<32x32xf32> to vector<32xf32>
    %165 = vector.shape_cast %164 : vector<32xf32> to vector<32x1xf32>
    %166 = vector.broadcast %165 : vector<32x1xf32> to vector<32x32xf32>
    %167 = arith.cmpf oge, %156, %166 : vector<32x32xf32>
    %cst_45 = arith.constant 1.000000e+30 : f32
    %168 = vector.broadcast %cst_45 : f32 to vector<32x32xf32>
    %169 = arith.select %167, %155, %168 : vector<32x32xi1>, vector<32x32xf32>
    %cst_46 = arith.constant dense<0x7F800000> : vector<32xf32>
    %170 = vector.multi_reduction <minimumf>, %169, %cst_46 [1] : vector<32x32xf32> to vector<32xf32>
    %171 = vector.shape_cast %170 : vector<32xf32> to vector<32x1xf32>
    %cst_47 = arith.constant dense<0xFF800000> : vector<32xf32>
    %172 = vector.multi_reduction <maximumf>, %156, %cst_47 [0] : vector<32x32xf32> to vector<32xf32>
    %173 = vector.shape_cast %172 : vector<32xf32> to vector<1x32xf32>
    %174 = vector.broadcast %173 : vector<1x32xf32> to vector<32x32xf32>
    %175 = arith.cmpf oge, %156, %174 : vector<32x32xf32>
    %cst_48 = arith.constant 1.000000e+30 : f32
    %176 = vector.broadcast %cst_48 : f32 to vector<32x32xf32>
    %177 = arith.select %175, %155, %176 : vector<32x32xi1>, vector<32x32xf32>
    %cst_49 = arith.constant dense<0x7F800000> : vector<32xf32>
    %178 = vector.multi_reduction <minimumf>, %177, %cst_49 [0] : vector<32x32xf32> to vector<32xf32>
    %179 = vector.shape_cast %178 : vector<32xf32> to vector<1x32xf32>
    %cst_50 = arith.constant 2.500000e-03 : f32
    %180 = vector.broadcast %cst_50 : f32 to vector<32x1xf32>
    %181 = arith.cmpf olt, %171, %180 : vector<32x1xf32>
    %182 = arith.extui %181 : vector<32x1xi1> to vector<32x1xi32>
    %183 = arith.sitofp %182 : vector<32x1xi32> to vector<32x1xf32>
    %cst_51 = arith.constant 2.500000e-03 : f32
    %184 = vector.broadcast %cst_51 : f32 to vector<1x32xf32>
    %185 = arith.cmpf olt, %179, %184 : vector<1x32xf32>
    %186 = arith.extui %185 : vector<1x32xi1> to vector<1x32xi32>
    %187 = arith.sitofp %186 : vector<1x32xi32> to vector<1x32xf32>
    %188 = vector.shape_cast %183 : vector<32x1xf32> to vector<1x32x1xf32>
    %cst_52 = arith.constant dense<0.000000e+00> : vector<1xf32>
    %189 = vector.multi_reduction <add>, %188, %cst_52 [1, 2] : vector<1x32x1xf32> to vector<1xf32>
    %190 = vector.shape_cast %189 : vector<1xf32> to vector<1x1x1xf32>
    %191 = vector.extract %190[0, 0, 0] : f32 from vector<1x1x1xf32>
    %192 = vector.shape_cast %187 : vector<1x32xf32> to vector<1x1x32xf32>
    %cst_53 = arith.constant dense<0.000000e+00> : vector<1xf32>
    %193 = vector.multi_reduction <add>, %192, %cst_53 [1, 2] : vector<1x1x32xf32> to vector<1xf32>
    %194 = vector.shape_cast %193 : vector<1xf32> to vector<1x1x1xf32>
    %195 = vector.extract %194[0, 0, 0] : f32 from vector<1x1x1xf32>
    %196 = arith.addf %191, %195 : f32
    %cst_54 = arith.constant 1.562500e-02 : f32
    %197 = arith.mulf %196, %cst_54 : f32
    %cst_55 = arith.constant 1.000000e+00 : f32
    %198 = arith.subf %cst_55, %197 : f32
    %cst_56 = arith.constant 5.000000e-01 : f32
    %199 = vector.broadcast %cst_56 : f32 to vector<32x1xf32>
    %200 = arith.cmpf oge, %183, %199 : vector<32x1xf32>
    %201 = vector.broadcast %198 : f32 to vector<32x1xf32>
    %202 = vector.broadcast %197 : f32 to vector<32x1xf32>
    %203 = arith.select %200, %201, %202 : vector<32x1xi1>, vector<32x1xf32>
    %204 = math.log %19 : vector<32x1xf32>
    %cst_57 = arith.constant -1.000000e+02 : f32
    %205 = vector.broadcast %cst_57 : f32 to vector<32x1xf32>
    %206 = arith.maximumf %204, %205 : vector<32x1xf32>
    %cst_58 = arith.constant 1.000000e+00 : f32
    %207 = vector.broadcast %cst_58 : f32 to vector<32x1xf32>
    %208 = arith.subf %207, %19 : vector<32x1xf32>
    %209 = math.log %208 : vector<32x1xf32>
    %cst_59 = arith.constant -1.000000e+02 : f32
    %210 = vector.broadcast %cst_59 : f32 to vector<32x1xf32>
    %211 = arith.maximumf %209, %210 : vector<32x1xf32>
    %212 = arith.mulf %183, %206 : vector<32x1xf32>
    %cst_60 = arith.constant 1.000000e+00 : f32
    %213 = vector.broadcast %cst_60 : f32 to vector<32x1xf32>
    %214 = arith.subf %213, %183 : vector<32x1xf32>
    %215 = arith.mulf %214, %211 : vector<32x1xf32>
    %216 = arith.addf %212, %215 : vector<32x1xf32>
    %cst_61 = arith.constant 0.000000e+00 : f32
    %217 = vector.broadcast %cst_61 : f32 to vector<32x1xf32>
    %218 = arith.subf %217, %216 : vector<32x1xf32>
    %219 = arith.mulf %203, %218 : vector<32x1xf32>
    %220 = vector.shape_cast %219 : vector<32x1xf32> to vector<1x32x1xf32>
    %cst_62 = arith.constant dense<0.000000e+00> : vector<1xf32>
    %221 = vector.multi_reduction <add>, %220, %cst_62 [1, 2] : vector<1x32x1xf32> to vector<1xf32>
    %222 = vector.shape_cast %221 : vector<1xf32> to vector<1x1x1xf32>
    %223 = vector.extract %222[0, 0, 0] : f32 from vector<1x1x1xf32>
    %cst_63 = arith.constant 5.000000e-01 : f32
    %224 = vector.broadcast %cst_63 : f32 to vector<1x32xf32>
    %225 = arith.cmpf oge, %187, %224 : vector<1x32xf32>
    %226 = vector.broadcast %198 : f32 to vector<1x32xf32>
    %227 = vector.broadcast %197 : f32 to vector<1x32xf32>
    %228 = arith.select %225, %226, %227 : vector<1x32xi1>, vector<1x32xf32>
    %229 = math.log %22 : vector<1x32xf32>
    %cst_64 = arith.constant -1.000000e+02 : f32
    %230 = vector.broadcast %cst_64 : f32 to vector<1x32xf32>
    %231 = arith.maximumf %229, %230 : vector<1x32xf32>
    %cst_65 = arith.constant 1.000000e+00 : f32
    %232 = vector.broadcast %cst_65 : f32 to vector<1x32xf32>
    %233 = arith.subf %232, %22 : vector<1x32xf32>
    %234 = math.log %233 : vector<1x32xf32>
    %cst_66 = arith.constant -1.000000e+02 : f32
    %235 = vector.broadcast %cst_66 : f32 to vector<1x32xf32>
    %236 = arith.maximumf %234, %235 : vector<1x32xf32>
    %237 = arith.mulf %187, %231 : vector<1x32xf32>
    %cst_67 = arith.constant 1.000000e+00 : f32
    %238 = vector.broadcast %cst_67 : f32 to vector<1x32xf32>
    %239 = arith.subf %238, %187 : vector<1x32xf32>
    %240 = arith.mulf %239, %236 : vector<1x32xf32>
    %241 = arith.addf %237, %240 : vector<1x32xf32>
    %cst_68 = arith.constant 0.000000e+00 : f32
    %242 = vector.broadcast %cst_68 : f32 to vector<1x32xf32>
    %243 = arith.subf %242, %241 : vector<1x32xf32>
    %244 = arith.mulf %228, %243 : vector<1x32xf32>
    %245 = vector.shape_cast %244 : vector<1x32xf32> to vector<1x1x32xf32>
    %cst_69 = arith.constant dense<0.000000e+00> : vector<1xf32>
    %246 = vector.multi_reduction <add>, %245, %cst_69 [1, 2] : vector<1x1x32xf32> to vector<1xf32>
    %247 = vector.shape_cast %246 : vector<1xf32> to vector<1x1x1xf32>
    %248 = vector.extract %247[0, 0, 0] : f32 from vector<1x1x1xf32>
    %249 = arith.addf %223, %248 : f32
    %cst_70 = arith.constant 1.562500e-02 : f32
    %250 = arith.mulf %249, %cst_70 : f32
    %cst_71 = arith.constant 5.000000e-01 : f32
    %251 = vector.broadcast %cst_71 : f32 to vector<32x1xf32>
    %252 = arith.cmpf oge, %19, %251 : vector<32x1xf32>
    %253 = arith.extui %252 : vector<32x1xi1> to vector<32x1xi32>
    %254 = arith.sitofp %253 : vector<32x1xi32> to vector<32x1xf32>
    %cst_72 = arith.constant 5.000000e-01 : f32
    %255 = vector.broadcast %cst_72 : f32 to vector<1x32xf32>
    %256 = arith.cmpf oge, %22, %255 : vector<1x32xf32>
    %257 = arith.extui %256 : vector<1x32xi1> to vector<1x32xi32>
    %258 = arith.sitofp %257 : vector<1x32xi32> to vector<1x32xf32>
    %259 = arith.mulf %254, %183 : vector<32x1xf32>
    %260 = vector.shape_cast %259 : vector<32x1xf32> to vector<1x32x1xf32>
    %cst_73 = arith.constant dense<0.000000e+00> : vector<1xf32>
    %261 = vector.multi_reduction <add>, %260, %cst_73 [1, 2] : vector<1x32x1xf32> to vector<1xf32>
    %262 = vector.shape_cast %261 : vector<1xf32> to vector<1x1x1xf32>
    %263 = vector.extract %262[0, 0, 0] : f32 from vector<1x1x1xf32>
    %264 = arith.mulf %258, %187 : vector<1x32xf32>
    %265 = vector.shape_cast %264 : vector<1x32xf32> to vector<1x1x32xf32>
    %cst_74 = arith.constant dense<0.000000e+00> : vector<1xf32>
    %266 = vector.multi_reduction <add>, %265, %cst_74 [1, 2] : vector<1x1x32xf32> to vector<1xf32>
    %267 = vector.shape_cast %266 : vector<1xf32> to vector<1x1x1xf32>
    %268 = vector.extract %267[0, 0, 0] : f32 from vector<1x1x1xf32>
    %269 = arith.addf %263, %268 : f32
    %270 = vector.shape_cast %254 : vector<32x1xf32> to vector<1x32x1xf32>
    %cst_75 = arith.constant dense<0.000000e+00> : vector<1xf32>
    %271 = vector.multi_reduction <add>, %270, %cst_75 [1, 2] : vector<1x32x1xf32> to vector<1xf32>
    %272 = vector.shape_cast %271 : vector<1xf32> to vector<1x1x1xf32>
    %273 = vector.extract %272[0, 0, 0] : f32 from vector<1x1x1xf32>
    %274 = vector.shape_cast %258 : vector<1x32xf32> to vector<1x1x32xf32>
    %cst_76 = arith.constant dense<0.000000e+00> : vector<1xf32>
    %275 = vector.multi_reduction <add>, %274, %cst_76 [1, 2] : vector<1x1x32xf32> to vector<1xf32>
    %276 = vector.shape_cast %275 : vector<1xf32> to vector<1x1x1xf32>
    %277 = vector.extract %276[0, 0, 0] : f32 from vector<1x1x1xf32>
    %278 = arith.addf %273, %277 : f32
    %cst_77 = arith.constant 9.99999996E-13 : f32
    %279 = arith.maximumf %278, %cst_77 : f32
    %280 = arith.divf %269, %279 : f32
    %cst_78 = arith.constant 9.99999996E-13 : f32
    %281 = arith.maximumf %196, %cst_78 : f32
    %282 = arith.divf %269, %281 : f32
    %cst_79 = arith.constant dense<0x7F800000> : vector<32xf32>
    %283 = vector.multi_reduction <minimumf>, %155, %cst_79 [1] : vector<32x32xf32> to vector<32xf32>
    %284 = vector.shape_cast %283 : vector<32xf32> to vector<32x1xf32>
    %cst_80 = arith.constant dense<0xFF800000> : vector<32xf32>
    %285 = vector.multi_reduction <maximumf>, %155, %cst_80 [1] : vector<32x32xf32> to vector<32xf32>
    %286 = vector.shape_cast %285 : vector<32xf32> to vector<32x1xf32>
    %cst_81 = arith.constant dense<0x7F800000> : vector<32xf32>
    %287 = vector.multi_reduction <minimumf>, %155, %cst_81 [0] : vector<32x32xf32> to vector<32xf32>
    %288 = vector.shape_cast %287 : vector<32xf32> to vector<1x32xf32>
    %cst_82 = arith.constant dense<0xFF800000> : vector<32xf32>
    %289 = vector.multi_reduction <maximumf>, %155, %cst_82 [0] : vector<32x32xf32> to vector<32xf32>
    %290 = vector.shape_cast %289 : vector<32xf32> to vector<1x32xf32>
    %cst_83 = arith.constant 1.406250e-03 : f32
    %291 = vector.broadcast %cst_83 : f32 to vector<32x1xf32>
    %292 = arith.cmpf olt, %284, %291 : vector<32x1xf32>
    %cst_84 = arith.constant 0.00999999977 : f32
    %293 = vector.broadcast %cst_84 : f32 to vector<32x1xf32>
    %294 = arith.cmpf ogt, %286, %293 : vector<32x1xf32>
    %295 = arith.andi %292, %294 : vector<32x1xi1>
    %296 = arith.extui %295 : vector<32x1xi1> to vector<32x1xi32>
    %297 = arith.sitofp %296 : vector<32x1xi32> to vector<32x1xf32>
    %cst_85 = arith.constant 1.406250e-03 : f32
    %298 = vector.broadcast %cst_85 : f32 to vector<1x32xf32>
    %299 = arith.cmpf olt, %288, %298 : vector<1x32xf32>
    %cst_86 = arith.constant 0.00999999977 : f32
    %300 = vector.broadcast %cst_86 : f32 to vector<1x32xf32>
    %301 = arith.cmpf ogt, %290, %300 : vector<1x32xf32>
    %302 = arith.andi %299, %301 : vector<1x32xi1>
    %303 = arith.extui %302 : vector<1x32xi1> to vector<1x32xi32>
    %304 = arith.sitofp %303 : vector<1x32xi32> to vector<1x32xf32>
    %cst_87 = arith.constant 1.406250e-03 : f32
    %305 = vector.broadcast %cst_87 : f32 to vector<32x32xf32>
    %306 = arith.cmpf olt, %155, %305 : vector<32x32xf32>
    %cst_88 = arith.constant 1.000000e-01 : f32
    %307 = vector.broadcast %cst_88 : f32 to vector<32x32xf32>
    %308 = arith.subf %163, %307 : vector<32x32xf32>
    %cst_89 = arith.constant 0.000000e+00 : f32
    %309 = vector.broadcast %cst_89 : f32 to vector<32x32xf32>
    %310 = arith.maximumf %308, %309 : vector<32x32xf32>
    %cst_90 = arith.constant 0.000000e+00 : f32
    %311 = vector.broadcast %cst_90 : f32 to vector<32x32xf32>
    %312 = arith.select %306, %310, %311 : vector<32x32xi1>, vector<32x32xf32>
    %cst_91 = arith.constant 0.00999999977 : f32
    %313 = vector.broadcast %cst_91 : f32 to vector<32x32xf32>
    %314 = arith.cmpf ogt, %155, %313 : vector<32x32xf32>
    %cst_92 = arith.constant 1.400000e+00 : f32
    %315 = vector.broadcast %cst_92 : f32 to vector<32x32xf32>
    %316 = arith.subf %315, %163 : vector<32x32xf32>
    %cst_93 = arith.constant 0.000000e+00 : f32
    %317 = vector.broadcast %cst_93 : f32 to vector<32x32xf32>
    %318 = arith.maximumf %316, %317 : vector<32x32xf32>
    %cst_94 = arith.constant 0.000000e+00 : f32
    %319 = vector.broadcast %cst_94 : f32 to vector<32x32xf32>
    %320 = arith.select %314, %318, %319 : vector<32x32xi1>, vector<32x32xf32>
    %cst_95 = arith.constant 1.000000e-01 : f32
    %321 = vector.broadcast %cst_95 : f32 to vector<32x32xf32>
    %322 = arith.subf %163, %321 : vector<32x32xf32>
    %cst_96 = arith.constant 1.600000e+01 : f32
    %323 = vector.broadcast %cst_96 : f32 to vector<32x32xf32>
    %324 = arith.mulf %323, %322 : vector<32x32xf32>
    %325 = arith.mulf %324, %312 : vector<32x32xf32>
    %cst_97 = arith.constant 1.400000e+00 : f32
    %326 = vector.broadcast %cst_97 : f32 to vector<32x32xf32>
    %327 = arith.subf %326, %163 : vector<32x32xf32>
    %cst_98 = arith.constant 1.600000e+01 : f32
    %328 = vector.broadcast %cst_98 : f32 to vector<32x32xf32>
    %329 = arith.mulf %328, %327 : vector<32x32xf32>
    %330 = arith.mulf %329, %320 : vector<32x32xf32>
    %cst_99 = arith.constant dense<0xFF800000> : vector<32xf32>
    %331 = vector.multi_reduction <maximumf>, %325, %cst_99 [1] : vector<32x32xf32> to vector<32xf32>
    %332 = vector.shape_cast %331 : vector<32xf32> to vector<32x1xf32>
    %333 = vector.broadcast %332 : vector<32x1xf32> to vector<32x32xf32>
    %334 = arith.subf %325, %333 : vector<32x32xf32>
    %335 = math.exp %334 : vector<32x32xf32>
    %cst_100 = arith.constant dense<0.000000e+00> : vector<32xf32>
    %336 = vector.multi_reduction <add>, %335, %cst_100 [1] : vector<32x32xf32> to vector<32xf32>
    %337 = vector.shape_cast %336 : vector<32xf32> to vector<32x1xf32>
    %338 = math.log %337 : vector<32x1xf32>
    %339 = arith.addf %332, %338 : vector<32x1xf32>
    %cst_101 = arith.constant dense<0xFF800000> : vector<32xf32>
    %340 = vector.multi_reduction <maximumf>, %330, %cst_101 [1] : vector<32x32xf32> to vector<32xf32>
    %341 = vector.shape_cast %340 : vector<32xf32> to vector<32x1xf32>
    %342 = vector.broadcast %341 : vector<32x1xf32> to vector<32x32xf32>
    %343 = arith.subf %330, %342 : vector<32x32xf32>
    %344 = math.exp %343 : vector<32x32xf32>
    %cst_102 = arith.constant dense<0.000000e+00> : vector<32xf32>
    %345 = vector.multi_reduction <add>, %344, %cst_102 [1] : vector<32x32xf32> to vector<32xf32>
    %346 = vector.shape_cast %345 : vector<32xf32> to vector<32x1xf32>
    %347 = math.log %346 : vector<32x1xf32>
    %348 = arith.addf %341, %347 : vector<32x1xf32>
    %349 = arith.addf %339, %348 : vector<32x1xf32>
    %cst_103 = arith.constant 2.000000e+01 : f32
    %350 = vector.broadcast %cst_103 : f32 to vector<32x1xf32>
    %351 = arith.cmpf ogt, %349, %350 : vector<32x1xf32>
    %cst_104 = arith.constant 2.000000e+01 : f32
    %352 = vector.broadcast %cst_104 : f32 to vector<32x1xf32>
    %353 = arith.minimumf %349, %352 : vector<32x1xf32>
    %354 = math.exp %353 : vector<32x1xf32>
    %355 = math.log1p %354 : vector<32x1xf32>
    %356 = arith.select %351, %349, %355 : vector<32x1xi1>, vector<32x1xf32>
    %cst_105 = arith.constant 6.250000e-02 : f32
    %357 = vector.broadcast %cst_105 : f32 to vector<32x1xf32>
    %358 = arith.mulf %356, %357 : vector<32x1xf32>
    %cst_106 = arith.constant dense<0xFF800000> : vector<32xf32>
    %359 = vector.multi_reduction <maximumf>, %325, %cst_106 [0] : vector<32x32xf32> to vector<32xf32>
    %360 = vector.shape_cast %359 : vector<32xf32> to vector<1x32xf32>
    %361 = vector.broadcast %360 : vector<1x32xf32> to vector<32x32xf32>
    %362 = arith.subf %325, %361 : vector<32x32xf32>
    %363 = math.exp %362 : vector<32x32xf32>
    %cst_107 = arith.constant dense<0.000000e+00> : vector<32xf32>
    %364 = vector.multi_reduction <add>, %363, %cst_107 [0] : vector<32x32xf32> to vector<32xf32>
    %365 = vector.shape_cast %364 : vector<32xf32> to vector<1x32xf32>
    %366 = math.log %365 : vector<1x32xf32>
    %367 = arith.addf %360, %366 : vector<1x32xf32>
    %cst_108 = arith.constant dense<0xFF800000> : vector<32xf32>
    %368 = vector.multi_reduction <maximumf>, %330, %cst_108 [0] : vector<32x32xf32> to vector<32xf32>
    %369 = vector.shape_cast %368 : vector<32xf32> to vector<1x32xf32>
    %370 = vector.broadcast %369 : vector<1x32xf32> to vector<32x32xf32>
    %371 = arith.subf %330, %370 : vector<32x32xf32>
    %372 = math.exp %371 : vector<32x32xf32>
    %cst_109 = arith.constant dense<0.000000e+00> : vector<32xf32>
    %373 = vector.multi_reduction <add>, %372, %cst_109 [0] : vector<32x32xf32> to vector<32xf32>
    %374 = vector.shape_cast %373 : vector<32xf32> to vector<1x32xf32>
    %375 = math.log %374 : vector<1x32xf32>
    %376 = arith.addf %369, %375 : vector<1x32xf32>
    %377 = arith.addf %367, %376 : vector<1x32xf32>
    %cst_110 = arith.constant 2.000000e+01 : f32
    %378 = vector.broadcast %cst_110 : f32 to vector<1x32xf32>
    %379 = arith.cmpf ogt, %377, %378 : vector<1x32xf32>
    %cst_111 = arith.constant 2.000000e+01 : f32
    %380 = vector.broadcast %cst_111 : f32 to vector<1x32xf32>
    %381 = arith.minimumf %377, %380 : vector<1x32xf32>
    %382 = math.exp %381 : vector<1x32xf32>
    %383 = math.log1p %382 : vector<1x32xf32>
    %384 = arith.select %379, %377, %383 : vector<1x32xi1>, vector<1x32xf32>
    %cst_112 = arith.constant 6.250000e-02 : f32
    %385 = vector.broadcast %cst_112 : f32 to vector<1x32xf32>
    %386 = arith.mulf %384, %385 : vector<1x32xf32>
    %387 = arith.mulf %358, %297 : vector<32x1xf32>
    %388 = vector.shape_cast %387 : vector<32x1xf32> to vector<1x32x1xf32>
    %cst_113 = arith.constant dense<0.000000e+00> : vector<1xf32>
    %389 = vector.multi_reduction <add>, %388, %cst_113 [1, 2] : vector<1x32x1xf32> to vector<1xf32>
    %390 = vector.shape_cast %389 : vector<1xf32> to vector<1x1x1xf32>
    %391 = vector.extract %390[0, 0, 0] : f32 from vector<1x1x1xf32>
    %392 = vector.shape_cast %297 : vector<32x1xf32> to vector<1x32x1xf32>
    %cst_114 = arith.constant dense<0.000000e+00> : vector<1xf32>
    %393 = vector.multi_reduction <add>, %392, %cst_114 [1, 2] : vector<1x32x1xf32> to vector<1xf32>
    %394 = vector.shape_cast %393 : vector<1xf32> to vector<1x1x1xf32>
    %395 = vector.extract %394[0, 0, 0] : f32 from vector<1x1x1xf32>
    %cst_115 = arith.constant 1.000000e+00 : f32
    %396 = arith.maximumf %395, %cst_115 : f32
    %397 = arith.divf %391, %396 : f32
    %398 = arith.mulf %386, %304 : vector<1x32xf32>
    %399 = vector.shape_cast %398 : vector<1x32xf32> to vector<1x1x32xf32>
    %cst_116 = arith.constant dense<0.000000e+00> : vector<1xf32>
    %400 = vector.multi_reduction <add>, %399, %cst_116 [1, 2] : vector<1x1x32xf32> to vector<1xf32>
    %401 = vector.shape_cast %400 : vector<1xf32> to vector<1x1x1xf32>
    %402 = vector.extract %401[0, 0, 0] : f32 from vector<1x1x1xf32>
    %403 = vector.shape_cast %304 : vector<1x32xf32> to vector<1x1x32xf32>
    %cst_117 = arith.constant dense<0.000000e+00> : vector<1xf32>
    %404 = vector.multi_reduction <add>, %403, %cst_117 [1, 2] : vector<1x1x32xf32> to vector<1xf32>
    %405 = vector.shape_cast %404 : vector<1xf32> to vector<1x1x1xf32>
    %406 = vector.extract %405[0, 0, 0] : f32 from vector<1x1x1xf32>
    %cst_118 = arith.constant 1.000000e+00 : f32
    %407 = arith.maximumf %406, %cst_118 : f32
    %408 = arith.divf %402, %407 : f32
    %409 = arith.addf %397, %408 : f32
    %cst_119 = arith.constant 5.000000e-01 : f32
    %410 = arith.mulf %cst_119, %409 : f32
    %cst_120 = arith.constant 1.406250e-03 : f32
    %411 = vector.broadcast %cst_120 : f32 to vector<32x1xf32>
    %412 = arith.cmpf olt, %284, %411 : vector<32x1xf32>
    %413 = arith.extui %412 : vector<32x1xi1> to vector<32x1xi32>
    %414 = arith.sitofp %413 : vector<32x1xi32> to vector<32x1xf32>
    %cst_121 = arith.constant 1.406250e-03 : f32
    %415 = vector.broadcast %cst_121 : f32 to vector<32x1xf32>
    %416 = arith.cmpf olt, %171, %415 : vector<32x1xf32>
    %417 = arith.extui %416 : vector<32x1xi1> to vector<32x1xi32>
    %418 = arith.sitofp %417 : vector<32x1xi32> to vector<32x1xf32>
    %419 = arith.mulf %418, %414 : vector<32x1xf32>
    %420 = vector.shape_cast %419 : vector<32x1xf32> to vector<1x32x1xf32>
    %cst_122 = arith.constant dense<0.000000e+00> : vector<1xf32>
    %421 = vector.multi_reduction <add>, %420, %cst_122 [1, 2] : vector<1x32x1xf32> to vector<1xf32>
    %422 = vector.shape_cast %421 : vector<1xf32> to vector<1x1x1xf32>
    %423 = vector.extract %422[0, 0, 0] : f32 from vector<1x1x1xf32>
    %424 = vector.shape_cast %414 : vector<32x1xf32> to vector<1x32x1xf32>
    %cst_123 = arith.constant dense<0.000000e+00> : vector<1xf32>
    %425 = vector.multi_reduction <add>, %424, %cst_123 [1, 2] : vector<1x32x1xf32> to vector<1xf32>
    %426 = vector.shape_cast %425 : vector<1xf32> to vector<1x1x1xf32>
    %427 = vector.extract %426[0, 0, 0] : f32 from vector<1x1x1xf32>
    %cst_124 = arith.constant 9.99999996E-13 : f32
    %428 = arith.addf %427, %cst_124 : f32
    %429 = arith.divf %423, %428 : f32
    %430 = tpu.iota {dimensions = array<i32: 1>} : vector<1x8xi32>
    %c0_i32 = arith.constant 0 : i32
    %431 = vector.broadcast %c0_i32 : i32 to vector<1x8xi32>
    %432 = arith.cmpi eq, %430, %431 : vector<1x8xi32>
    %cst_125 = arith.constant 0.000000e+00 : f32
    %433 = vector.broadcast %92 : f32 to vector<1x8xf32>
    %434 = vector.broadcast %cst_125 : f32 to vector<1x8xf32>
    %435 = arith.select %432, %433, %434 : vector<1x8xi1>, vector<1x8xf32>
    %c1_i32 = arith.constant 1 : i32
    %436 = vector.broadcast %c1_i32 : i32 to vector<1x8xi32>
    %437 = arith.cmpi eq, %430, %436 : vector<1x8xi32>
    %cst_126 = arith.constant 0.000000e+00 : f32
    %438 = vector.broadcast %122 : f32 to vector<1x8xf32>
    %439 = vector.broadcast %cst_126 : f32 to vector<1x8xf32>
    %440 = arith.select %437, %438, %439 : vector<1x8xi1>, vector<1x8xf32>
    %441 = arith.addf %435, %440 : vector<1x8xf32>
    %c2_i32 = arith.constant 2 : i32
    %442 = vector.broadcast %c2_i32 : i32 to vector<1x8xi32>
    %443 = arith.cmpi eq, %430, %442 : vector<1x8xi32>
    %cst_127 = arith.constant 0.000000e+00 : f32
    %444 = vector.broadcast %133 : f32 to vector<1x8xf32>
    %445 = vector.broadcast %cst_127 : f32 to vector<1x8xf32>
    %446 = arith.select %443, %444, %445 : vector<1x8xi1>, vector<1x8xf32>
    %447 = arith.addf %441, %446 : vector<1x8xf32>
    %c3_i32 = arith.constant 3 : i32
    %448 = vector.broadcast %c3_i32 : i32 to vector<1x8xi32>
    %449 = arith.cmpi eq, %430, %448 : vector<1x8xi32>
    %cst_128 = arith.constant 0.000000e+00 : f32
    %450 = vector.broadcast %250 : f32 to vector<1x8xf32>
    %451 = vector.broadcast %cst_128 : f32 to vector<1x8xf32>
    %452 = arith.select %449, %450, %451 : vector<1x8xi1>, vector<1x8xf32>
    %453 = arith.addf %447, %452 : vector<1x8xf32>
    %c4_i32 = arith.constant 4 : i32
    %454 = vector.broadcast %c4_i32 : i32 to vector<1x8xi32>
    %455 = arith.cmpi eq, %430, %454 : vector<1x8xi32>
    %cst_129 = arith.constant 0.000000e+00 : f32
    %456 = vector.broadcast %280 : f32 to vector<1x8xf32>
    %457 = vector.broadcast %cst_129 : f32 to vector<1x8xf32>
    %458 = arith.select %455, %456, %457 : vector<1x8xi1>, vector<1x8xf32>
    %459 = arith.addf %453, %458 : vector<1x8xf32>
    %c5_i32 = arith.constant 5 : i32
    %460 = vector.broadcast %c5_i32 : i32 to vector<1x8xi32>
    %461 = arith.cmpi eq, %430, %460 : vector<1x8xi32>
    %cst_130 = arith.constant 0.000000e+00 : f32
    %462 = vector.broadcast %282 : f32 to vector<1x8xf32>
    %463 = vector.broadcast %cst_130 : f32 to vector<1x8xf32>
    %464 = arith.select %461, %462, %463 : vector<1x8xi1>, vector<1x8xf32>
    %465 = arith.addf %459, %464 : vector<1x8xf32>
    %c6_i32 = arith.constant 6 : i32
    %466 = vector.broadcast %c6_i32 : i32 to vector<1x8xi32>
    %467 = arith.cmpi eq, %430, %466 : vector<1x8xi32>
    %cst_131 = arith.constant 0.000000e+00 : f32
    %468 = vector.broadcast %410 : f32 to vector<1x8xf32>
    %469 = vector.broadcast %cst_131 : f32 to vector<1x8xf32>
    %470 = arith.select %467, %468, %469 : vector<1x8xi1>, vector<1x8xf32>
    %471 = arith.addf %465, %470 : vector<1x8xf32>
    %c7_i32 = arith.constant 7 : i32
    %472 = vector.broadcast %c7_i32 : i32 to vector<1x8xi32>
    %473 = arith.cmpi eq, %430, %472 : vector<1x8xi32>
    %cst_132 = arith.constant 0.000000e+00 : f32
    %474 = vector.broadcast %429 : f32 to vector<1x8xf32>
    %475 = vector.broadcast %cst_132 : f32 to vector<1x8xf32>
    %476 = arith.select %473, %474, %475 : vector<1x8xi1>, vector<1x8xf32>
    %477 = arith.addf %471, %476 : vector<1x8xf32>
    %c0_133 = arith.constant 0 : index
    %c0_134 = arith.constant 0 : index
    %478 = vector.load %arg5[%c0_133, %c0_134] : memref<1x8xf32, #tpu.memory_space<vmem>>, vector<1x8xf32>
    tpu.vector_store %arg5[%c0_133, %c0_134], %477 {strides = array<i32>} : memref<1x8xf32, #tpu.memory_space<vmem>>, vector<1x8xf32>,
    return
  }
  func.func @transform_0(%arg0: i32) -> (i32, i32) {
    %c0_i32 = arith.constant 0 : i32
    %c0_i32_0 = arith.constant 0 : i32
    %c0_i32_1 = arith.constant 0 : i32
    return %c0_i32, %c0_i32_0 : i32, i32
  }
  func.func @transform_1(%arg0: i32) -> (i32, i32) {
    %c0_i32 = arith.constant 0 : i32
    %c0_i32_0 = arith.constant 0 : i32
    %c0_i32_1 = arith.constant 0 : i32
    return %c0_i32, %c0_i32_0 : i32, i32
  }
  func.func @transform_2(%arg0: i32) -> (i32, i32) {
    %c0_i32 = arith.constant 0 : i32
    %c0_i32_0 = arith.constant 0 : i32
    %c0_i32_1 = arith.constant 0 : i32
    return %c0_i32, %c0_i32_0 : i32, i32
  }
  func.func @transform_3(%arg0: i32) -> (i32, i32) {
    %c0_i32 = arith.constant 0 : i32
    %c0_i32_0 = arith.constant 0 : i32
    %c0_i32_1 = arith.constant 0 : i32
    return %c0_i32, %c0_i32_0 : i32, i32
  }
  func.func @transform_4(%arg0: i32) -> (i32, i32) {
    %c0_i32 = arith.constant 0 : i32
    %c0_i32_0 = arith.constant 0 : i32
    %c0_i32_1 = arith.constant 0 : i32
    return %c0_i32, %c0_i32_0 : i32, i32
  }
}

</mosaic_0001>

<llo_original>
// kernel: forward.1
$region0: #{forward.1}
  #allocation0 [shape = 'u32[]', space=smem, size = 0x4, offset = 0x4, fixed_abs, tag = 'smem constant byte address 0x4 - core index']
  #allocation1 [shape = 'u32[144,128]{1,0:T(1,128)}', space=vmem, size = 0x12000, scoped, tag = 'internal scratch']
  %s0 = inlined_call_operand.vmem [shape: s32[32,2], index: 0, kind: input, shape index: {}]
  %s1 = inlined_call_operand.vmem [shape: f32[64,36], index: 1, kind: input, shape index: {}]
  %s2 = inlined_call_operand.vmem [shape: f32[36,64], index: 2, kind: input, shape index: {}]
  %s3 = inlined_call_operand.vmem [shape: f32[1,128], index: 3, kind: input, shape index: {}]
  %s4 = inlined_call_operand.vmem [shape: f32[1,8], index: 4, kind: output, shape index: {}]
  %s5 = sld [smem:[#allocation0]]
  $region26: #{forward.1} parent=0
    _
  %s7 = ssub.s32 1, %s5
  %s8 = scalar_select 0, %s7, %s5
  // Predicated region
  $region2: #{forward.1} parent=0 // pred_check
    _
  $region3: #{forward.1} parent=0 // pred_check_branch
    %10 = sbr.rel (0) target = $region5
  $region4: #{forward.1} parent=0 // pred_region
    _
  $region5: #{forward.1} parent=0 // pred_fallthru
    _
  // Predicated region
  $region6: #{forward.1} parent=0 // pred_check
    _
  $region7: #{forward.1} parent=0 // pred_check_branch
    %12 = sbr.rel (0) target = $region9
  $region8: #{forward.1} parent=0 // pred_region
    _
  $region9: #{forward.1} parent=0 // pred_fallthru
    _
  // Predicated region
  $region10: #{forward.1} parent=0 // pred_check
    _
  $region11: #{forward.1} parent=0 // pred_check_branch
    %14 = sbr.rel (0) target = $region13
  $region12: #{forward.1} parent=0 // pred_region
    _
  $region13: #{forward.1} parent=0 // pred_fallthru
    _
  // Predicated region
  $region14: #{forward.1} parent=0 // pred_check
    _
  $region15: #{forward.1} parent=0 // pred_check_branch
    %16 = sbr.rel (0) target = $region17
  $region16: #{forward.1} parent=0 // pred_region
    _
  $region17: #{forward.1} parent=0 // pred_fallthru
    _
  %v17 = vld [vmem:[%s0] sm:$0xff]
  %v18 = vld [vmem:[%s0 + $0x8] sm:$0xff]
  %v19 = vld [vmem:[%s0 + $0x10] sm:$0xff]
  %v20 = vld [vmem:[%s0 + $0x18] sm:$0xff]
  %v21 = vlaneseq
  %v22 = vand.u32 %v21, 127
  %23 = vset.pattern.permute.xlu0 0
  %24 = vperm.xlu0 %23, %v17
  %v25 = vpop.permute.xlu0 %24
  %26 = vset.pattern.permute.xlu0 0
  %27 = vperm.xlu0 %26, %v18
  %v28 = vpop.permute.xlu0 %27
  %29 = vset.pattern.permute.xlu0 0
  %30 = vperm.xlu0 %29, %v19
  %v31 = vpop.permute.xlu0 %30
  %32 = vset.pattern.permute.xlu0 0
  %33 = vperm.xlu0 %32, %v20
  %v34 = vpop.permute.xlu0 %33
  %vm35 = vcmp.eq.s32.totalorder %v22, %v25
  %vm36 = vcmp.eq.s32.totalorder %v22, %v28
  %vm37 = vcmp.eq.s32.totalorder %v22, %v31
  %vm38 = vcmp.eq.s32.totalorder %v22, %v34
  %v39 = vsel %vm35, 1, 0
  %v40 = vsel %vm36, 1, 0
  %v41 = vsel %vm37, 1, 0
  %v42 = vsel %vm38, 1, 0
  %v43 = vcvt.s32.f32 %v39
  %v44 = vcvt.s32.f32 %v40
  %v45 = vcvt.s32.f32 %v41
  %v46 = vcvt.s32.f32 %v42
  %47 = vset.pattern.permute.xlu0 1
  %48 = vperm.xlu0 %47, %v17
  %v49 = vpop.permute.xlu0 %48
  %50 = vset.pattern.permute.xlu0 1
  %51 = vperm.xlu0 %50, %v18
  %v52 = vpop.permute.xlu0 %51
  %53 = vset.pattern.permute.xlu0 1
  %54 = vperm.xlu0 %53, %v19
  %v55 = vpop.permute.xlu0 %54
  %56 = vset.pattern.permute.xlu0 1
  %57 = vperm.xlu0 %56, %v20
  %v58 = vpop.permute.xlu0 %57
  %vm59 = vcmp.eq.s32.totalorder %v22, %v49
  %vm60 = vcmp.eq.s32.totalorder %v22, %v52
  %vm61 = vcmp.eq.s32.totalorder %v22, %v55
  %vm62 = vcmp.eq.s32.totalorder %v22, %v58
  %v63 = vsel %vm59, 1, 0
  %v64 = vsel %vm60, 1, 0
  %v65 = vsel %vm61, 1, 0
  %v66 = vsel %vm62, 1, 0
  %v67 = vcvt.s32.f32 %v63
  %v68 = vcvt.s32.f32 %v64
  %v69 = vcvt.s32.f32 %v65
  %v70 = vcvt.s32.f32 %v66
  %v71 = vld [vmem:[%s1] sm:$0xff]
  %v72 = vld [vmem:[%s1 + $0x8] sm:$0xff]
  %v73 = vld [vmem:[%s1 + $0x10] sm:$0xff]
  %v74 = vld [vmem:[%s1 + $0x18] sm:$0xff]
  %v75 = vld [vmem:[%s1 + $0x20] sm:$0xff]
  %v76 = vld [vmem:[%s1 + $0x28] sm:$0xff]
  %v77 = vld [vmem:[%s1 + $0x30] sm:$0xff]
  %v78 = vld [vmem:[%s1 + $0x38] sm:$0xff]
  %vm79 = vcmask 523264
  %v81 = vsel %vm79, %v43, 0
  %v84 = vsel %vm79, %v44, 0
  %v87 = vsel %vm79, %v45, 0
  %v90 = vsel %vm79, %v46, 0
  %92 = vmatprep.subr.mxu0 0.0
  %93 = vmatpush1.msra.mxu0 %v71
  %94 = vmatprep.subr.mxu0 0.0
  %95 = vmatpush1.msra.mxu0 %v72
  %96 = vmatprep.subr.mxu0 0.0
  %97 = vmatpush1.msra.mxu0 %v73
  %98 = vmatprep.subr.mxu0 0.0
  %99 = vmatpush1.msra.mxu0 %v74
  %100 = vmatprep.subr.mxu0 0.0
  %101 = vmatpush1.msra.mxu0 %v75
  %102 = vmatprep.subr.mxu0 0.0
  %103 = vmatpush1.msra.mxu0 %v76
  %104 = vmatprep.subr.mxu0 0.0
  %105 = vmatpush1.msra.mxu0 %v77
  %106 = vmatprep.subr.mxu0 0.0
  %107 = vmatpush1.msra.mxu0 %v78
  %108 = vmatprep.subr.mxu0 0.0
  %109 = vmatpush1.msra.mxu0 0.0
  %110 = vmatprep.subr.mxu0 0.0
  %111 = vmatpush1.msra.mxu0 0.0
  %112 = vmatprep.subr.mxu0 0.0
  %113 = vmatpush1.msra.mxu0 0.0
  %114 = vmatprep.subr.mxu0 0.0
  %115 = vmatpush1.msra.mxu0 0.0
  %116 = vmatprep.subr.mxu0 0.0
  %117 = vmatpush1.msra.mxu0 0.0
  %118 = vmatprep.subr.mxu0 0.0
  %119 = vmatpush1.msra.mxu0 0.0
  %120 = vmatprep.subr.mxu0 0.0
  %121 = vmatpush1.msra.mxu0 0.0
  %122 = vmatprep.subr.mxu0 0.0
  %123 = vmatpush1.msra.mxu0 0.0
  %124 = vmatprep.subr.mxu0 0.0
  %125 = vmatpush1.msra.mxu0 0.0
  %126 = vmatprep.subr.mxu0 0.0
  %127 = vmatpush1.msra.mxu0 0.0
  %128 = vmatprep.subr.mxu0 0.0
  %129 = vmatpush1.msra.mxu0 0.0
  %130 = vmatprep.subr.mxu0 0.0
  %131 = vmatpush1.msra.mxu0 0.0
  %132 = vmatprep.subr.mxu0 0.0
  %133 = vmatpush1.msra.mxu0 0.0
  %134 = vmatprep.subr.mxu0 0.0
  %135 = vmatpush1.msra.mxu0 0.0
  %136 = vmatprep.subr.mxu0 0.0
  %137 = vmatpush1.msra.mxu0 0.0
  %138 = vmatprep.subr.mxu0 0.0
  %139 = vmatpush1.msra.mxu0 0.0
  %140 = vmatprep.subr.mxu0 0.0
  %141 = vmatpush1.msra.mxu0 0.0
  %142 = vmatprep.subr.mxu0 0.0
  %143 = vmatpush1.msra.mxu0 0.0
  %144 = vmatprep.subr.mxu0 0.0
  %145 = vmatpush1.msra.mxu0 0.0
  %146 = vmatprep.subr.mxu0 0.0
  %147 = vmatpush1.msra.mxu0 0.0
  %148 = vmatprep.subr.mxu0 0.0
  %149 = vmatpush1.msra.mxu0 0.0
  %150 = vmatprep.subr.mxu0 0.0
  %151 = vmatpush1.msra.mxu0 0.0
  %152 = vmatprep.subr.mxu0 0.0
  %153 = vmatpush1.msra.mxu0 0.0
  %154 = vmatprep.subr.mxu0 0.0
  %155 = vmatpush1.msra.mxu0 0.0
  %156 = vmatprep.mubr.f32.mxu0 0.0
  %157 = vmatmul.mubr.f32.gmra.mrb[0].mxu0 %v81
  %v158 = vpop.f32.mrb[0].mxu0
  %v159 = vadd.f32 0.0, %v158
  %v160 = vpop.f32.mrb[0].mxu0
  %161 = vmatprep.mubr.f32.mxu0 0.0
  %162 = vmatmul.mubr.f32.gmra.mrb[0].mxu0 %v84
  %v163 = vpop.f32.mrb[0].mxu0
  %v164 = vadd.f32 0.0, %v163
  %v165 = vpop.f32.mrb[0].mxu0
  %166 = vmatprep.mubr.f32.mxu0 0.0
  %167 = vmatmul.mubr.f32.gmra.mrb[0].mxu0 %v87
  %v168 = vpop.f32.mrb[0].mxu0
  %v169 = vadd.f32 0.0, %v168
  %v170 = vpop.f32.mrb[0].mxu0
  %171 = vmatprep.mubr.f32.mxu0 0.0
  %172 = vmatmul.mubr.f32.gmra.mrb[0].mxu0 %v90
  %v173 = vpop.f32.mrb[0].mxu0
  %v174 = vadd.f32 0.0, %v173
  %v175 = vpop.f32.mrb[0].mxu0
  %176 = vdwg.mxu0
  %v177 = vld [vmem:[%s2] sm:$0xff]
  %v178 = vld [vmem:[%s2 + $0x8] sm:$0xff]
  %v179 = vld [vmem:[%s2 + $0x10] sm:$0xff]
  %v180 = vld [vmem:[%s2 + $0x18] sm:$0xff]
  %v181 = vld [vmem:[%s2 + $0x20] sm:$0xf]
  %v183 = vsel %vm79, %v177, 0
  %v186 = vsel %vm79, %v178, 0
  %v189 = vsel %vm79, %v179, 0
  %v192 = vsel %vm79, %v180, 0
  %v195 = vsel %vm79, %v181, 0
  %v198 = vsel %vm79, %v67, 0
  %v201 = vsel %vm79, %v68, 0
  %v204 = vsel %vm79, %v69, 0
  %v207 = vsel %vm79, %v70, 0
  %209 = vmatprep.subr.mxu0 0.0
  %210 = vmatpush1.xpose.msra.mxu0 %v198
  %211 = vmatprep.subr.mxu0 0.0
  %212 = vmatpush1.xpose.msra.mxu0 %v201
  %213 = vmatprep.subr.mxu0 0.0
  %214 = vmatpush1.xpose.msra.mxu0 %v204
  %215 = vmatprep.subr.mxu0 0.0
  %216 = vmatpush1.xpose.msra.mxu0 %v207
  %217 = vmatprep.subr.mxu0 0.0
  %218 = vmatpush1.xpose.msra.mxu0 0.0
  %219 = vmatprep.subr.mxu0 0.0
  %220 = vmatpush1.xpose.msra.mxu0 0.0
  %221 = vmatprep.subr.mxu0 0.0
  %222 = vmatpush1.xpose.msra.mxu0 0.0
  %223 = vmatprep.subr.mxu0 0.0
  %224 = vmatpush1.xpose.msra.mxu0 0.0
  %225 = vmatprep.subr.mxu0 0.0
  %226 = vmatpush1.xpose.msra.mxu0 0.0
  %227 = vmatprep.subr.mxu0 0.0
  %228 = vmatpush1.xpose.msra.mxu0 0.0
  %229 = vmatprep.subr.mxu0 0.0
  %230 = vmatpush1.xpose.msra.mxu0 0.0
  %231 = vmatprep.subr.mxu0 0.0
  %232 = vmatpush1.xpose.msra.mxu0 0.0
  %233 = vmatprep.subr.mxu0 0.0
  %234 = vmatpush1.xpose.msra.mxu0 0.0
  %235 = vmatprep.subr.mxu0 0.0
  %236 = vmatpush1.xpose.msra.mxu0 0.0
  %237 = vmatprep.subr.mxu0 0.0
  %238 = vmatpush1.xpose.msra.mxu0 0.0
  %239 = vmatprep.subr.mxu0 0.0
  %240 = vmatpush1.xpose.msra.mxu0 0.0
  %241 = vmatprep.subr.mxu0 0.0
  %242 = vmatpush1.xpose.msra.mxu0 0.0
  %243 = vmatprep.subr.mxu0 0.0
  %244 = vmatpush1.xpose.msra.mxu0 0.0
  %245 = vmatprep.subr.mxu0 0.0
  %246 = vmatpush1.xpose.msra.mxu0 0.0
  %247 = vmatprep.subr.mxu0 0.0
  %248 = vmatpush1.xpose.msra.mxu0 0.0
  %249 = vmatprep.subr.mxu0 0.0
  %250 = vmatpush1.xpose.msra.mxu0 0.0
  %251 = vmatprep.subr.mxu0 0.0
  %252 = vmatpush1.xpose.msra.mxu0 0.0
  %253 = vmatprep.subr.mxu0 0.0
  %254 = vmatpush1.xpose.msra.mxu0 0.0
  %255 = vmatprep.subr.mxu0 0.0
  %256 = vmatpush1.xpose.msra.mxu0 0.0
  %257 = vmatprep.subr.mxu0 0.0
  %258 = vmatpush1.xpose.msra.mxu0 0.0
  %259 = vmatprep.subr.mxu0 0.0
  %260 = vmatpush1.xpose.msra.mxu0 0.0
  %261 = vmatprep.subr.mxu0 0.0
  %262 = vmatpush1.xpose.msra.mxu0 0.0
  %263 = vmatprep.subr.mxu0 0.0
  %264 = vmatpush1.xpose.msra.mxu0 0.0
  %265 = vmatprep.subr.mxu0 0.0
  %266 = vmatpush1.xpose.msra.mxu0 0.0
  %267 = vmatprep.subr.mxu0 0.0
  %268 = vmatpush1.xpose.msra.mxu0 0.0
  %269 = vmatprep.subr.mxu0 0.0
  %270 = vmatpush1.xpose.msra.mxu0 0.0
  %271 = vmatprep.subr.mxu0 0.0
  %272 = vmatpush1.xpose.msra.mxu0 0.0
  %273 = vmatprep.mubr.f32.mxu0 0.0
  %274 = vmatmul.mubr.f32.gmra.mrb[0].mxu0 %v183
  %v275 = vpop.f32.mrb[0].mxu0
  %v276 = vadd.f32 0.0, %v275
  %v277 = vpop.f32.mrb[0].mxu0
  %278 = vmatprep.mubr.f32.mxu0 0.0
  %279 = vmatmul.mubr.f32.gmra.mrb[0].mxu0 %v186
  %v280 = vpop.f32.mrb[0].mxu0
  %v281 = vadd.f32 0.0, %v280
  %v282 = vpop.f32.mrb[0].mxu0
  %283 = vmatprep.mubr.f32.mxu0 0.0
  %284 = vmatmul.mubr.f32.gmra.mrb[0].mxu0 %v189
  %v285 = vpop.f32.mrb[0].mxu0
  %v286 = vadd.f32 0.0, %v285
  %v287 = vpop.f32.mrb[0].mxu0
  %288 = vmatprep.mubr.f32.mxu0 0.0
  %289 = vmatmul.mubr.f32.gmra.mrb[0].mxu0 %v192
  %v290 = vpop.f32.mrb[0].mxu0
  %v291 = vadd.f32 0.0, %v290
  %v292 = vpop.f32.mrb[0].mxu0
  %293 = vmatprep.mubr.f32.mxu0 0.0
  %294 = vmatmul.mubr.f32.gmra.mrb[0].mxu0 %v195
  %v295 = vpop.f32.mrb[0].mxu0
  %v296 = vadd.f32 0.0, %v295
  %v297 = vpop.f32.mrb[0].mxu0
  %298 = vdwg.mxu0
  %v299 = vsel %vm79, %v43, -inf
  %v300 = vsel %vm79, %v44, -inf
  %v301 = vsel %vm79, %v45, -inf
  %v302 = vsel %vm79, %v46, -inf
  %v303 = vmax.f32 %v299, %v300
  %v304 = vmax.f32 %v301, %v302
  %v305 = vmax.f32 %v303, %v304
  %v306 = vrot.slane %v305, 4
  %v307 = vmax.f32 %v305, %v306
  %v308 = vrot.slane %v307, 2
  %v309 = vmax.f32 %v307, %v308
  %v310 = vrot.slane %v309, 1
  %v311 = vmax.f32 %v309, %v310
  %v312 = vsel %vm79, %v67, -inf
  %v313 = vsel %vm79, %v68, -inf
  %v314 = vsel %vm79, %v69, -inf
  %v315 = vsel %vm79, %v70, -inf
  %v316 = vmax.f32 %v312, %v313
  %v317 = vmax.f32 %v314, %v315
  %v318 = vmax.f32 %v316, %v317
  %v319 = vrot.slane %v318, 4
  %v320 = vmax.f32 %v318, %v319
  %v321 = vrot.slane %v320, 2
  %v322 = vmax.f32 %v320, %v321
  %v323 = vrot.slane %v322, 1
  %v324 = vmax.f32 %v322, %v323
  %v325 = vld [vmem:[%s3] sm:$0x1]
  %vm326 = vcmask 516096
  %v327 = vsel %vm326, %v311, 0.0
  %328 = vadd.xlane.f32.xlu0 %v327
  %v329 = vpop.xlane.xlu0 %328
  %v330 = vrot.slane %v329, 4
  %v331 = vadd.f32 %v329, %v330
  %v332 = vrot.slane %v331, 2
  %v333 = vadd.f32 %v331, %v332
  %v334 = vrot.slane %v333, 1
  %v335 = vadd.f32 %v333, %v334
  %s336 = vtos %v335
  %v337 = vsel %vm326, %v324, 0.0
  %338 = vadd.xlane.f32.xlu0 %v337
  %v339 = vpop.xlane.xlu0 %338
  %v340 = vrot.slane %v339, 4
  %v341 = vadd.f32 %v339, %v340
  %v342 = vrot.slane %v341, 2
  %v343 = vadd.f32 %v341, %v342
  %v344 = vrot.slane %v343, 1
  %v345 = vadd.f32 %v343, %v344
  %s346 = vtos %v345
  %s347 = sadd.f32 %s336, %s346
  %s348 = smul.f32 %s347, 0.0078125
  %s349 = ssub.f32 1.0, %s348
  %vm350 = vcmp.ge.f32.partialorder %v311, 0.5
  %v351 = vstv %s349
  %v352 = vstv %s348
  %v353 = vsel %vm350, %v351, %v352
  %v354 = vlog2.pop %v325
  %v355 = vmul.f32 %v354, 0.6931472
  %v356 = vmax.f32 %v355, -100.0
  %v357 = vsub.f32 1.0, %v325
  %v358 = vlog2.pop %v357
  %v359 = vmul.f32 %v358, 0.6931472
  %v360 = vmax.f32 %v359, -100.0
  %v361 = vmul.f32 %v311, %v356
  %v362 = vsub.f32 1.0, %v311
  %v363 = vmul.f32 %v362, %v360
  %v364 = vadd.f32 %v361, %v363
  %v365 = vsub.f32 0.0, %v364
  %v366 = vmul.f32 %v353, %v365
  %v367 = vsel %vm326, %v366, 0.0
  %368 = vadd.xlane.f32.xlu0 %v367
  %v369 = vpop.xlane.xlu0 %368
  %v370 = vrot.slane %v369, 4
  %v371 = vadd.f32 %v369, %v370
  %v372 = vrot.slane %v371, 2
  %v373 = vadd.f32 %v371, %v372
  %v374 = vrot.slane %v373, 1
  %v375 = vadd.f32 %v373, %v374
  %s376 = vtos %v375
  %vm377 = vcmp.ge.f32.partialorder %v324, 0.5
  %v378 = vsel %vm377, %v351, %v352
  %v380 = vlaneseq
  %v381 = vshrl.u32 %v380, 7
  %v382 = vsub.s32 0, %v381
  %v383 = vrot.slane %v356, %v382
  %384 = vrot.lane.b32.xlu0 %v383, 64
  %v385 = vpop.permute.xlu0 %384
  %v387 = vmul.f32 %v324, %v385
  %v388 = vsub.f32 1.0, %v324
  %v390 = vlaneseq
  %v391 = vshrl.u32 %v390, 7
  %v392 = vsub.s32 0, %v391
  %v393 = vrot.slane %v360, %v392
  %394 = vrot.lane.b32.xlu0 %v393, 64
  %v395 = vpop.permute.xlu0 %394
  %v397 = vmul.f32 %v388, %v395
  %v398 = vadd.f32 %v387, %v397
  %v399 = vsub.f32 0.0, %v398
  %v400 = vmul.f32 %v378, %v399
  %v401 = vsel %vm326, %v400, 0.0
  %402 = vadd.xlane.f32.xlu0 %v401
  %v403 = vpop.xlane.xlu0 %402
  %v404 = vrot.slane %v403, 4
  %v405 = vadd.f32 %v403, %v404
  %v406 = vrot.slane %v405, 2
  %v407 = vadd.f32 %v405, %v406
  %v408 = vrot.slane %v407, 1
  %v409 = vadd.f32 %v407, %v408
  %s410 = vtos %v409
  %s411 = sadd.f32 %s376, %s410
  %s412 = smul.f32 %s411, 0.0078125
  %vm413 = vcmp.ge.f32.partialorder %v325, 0.5
  %v414 = vsel %vm413, 1, 0
  %v415 = vcvt.s32.f32 %v414
  %v416 = vmul.f32 %v415, %v311
  %v417 = vsel %vm326, %v416, 0.0
  %418 = vadd.xlane.f32.xlu0 %v417
  %v419 = vpop.xlane.xlu0 %418
  %v420 = vrot.slane %v419, 4
  %v421 = vadd.f32 %v419, %v420
  %v422 = vrot.slane %v421, 2
  %v423 = vadd.f32 %v421, %v422
  %v424 = vrot.slane %v423, 1
  %v425 = vadd.f32 %v423, %v424
  %s426 = vtos %v425
  %v429 = vunpack.c.l.s4 1966171168
  %v430 = vunpack.c.0.s8 %v429
  %v431 = vlaneseq
  %v432 = vshrl.u32 %v431, 7
  %v433 = vsub.s32 %v430, %v432
  %v434 = vrot.slane %v324, %v433
  %v436 = vunpack.c.l.s4 1966171168
  %v437 = vunpack.c.0.s8 %v436
  %v438 = vlaneseq
  %v439 = vshrl.u32 %v438, 7
  %v440 = vsub.s32 %v437, %v439
  %v441 = vrot.slane %v434, %v440
  %442 = vrot.lane.b32.xlu0 %v441, 64
  %v443 = vpop.permute.xlu0 %442
  %v445 = vmul.f32 %v415, %v443
  %v447 = vlaneseq
  %v448 = vshrl.u32 %v447, 7
  %v449 = vsub.s32 0, %v448
  %v450 = vrot.slane %v445, %v449
  %451 = vrot.lane.b32.xlu0 %v450, 64
  %v452 = vpop.permute.xlu0 %451
  %v454 = vsel %vm326, %v452, 0.0
  %455 = vadd.xlane.f32.xlu0 %v454
  %v456 = vpop.xlane.xlu0 %455
  %v457 = vrot.slane %v456, 4
  %v458 = vadd.f32 %v456, %v457
  %v459 = vrot.slane %v458, 2
  %v460 = vadd.f32 %v458, %v459
  %v461 = vrot.slane %v460, 1
  %v462 = vadd.f32 %v460, %v461
  %s463 = vtos %v462
  %s464 = sadd.f32 %s426, %s463
  %v465 = vsel %vm326, %v415, 0.0
  %466 = vadd.xlane.f32.xlu0 %v465
  %v467 = vpop.xlane.xlu0 %466
  %v468 = vrot.slane %v467, 4
  %v469 = vadd.f32 %v467, %v468
  %v470 = vrot.slane %v469, 2
  %v471 = vadd.f32 %v469, %v470
  %v472 = vrot.slane %v471, 1
  %v473 = vadd.f32 %v471, %v472
  %s474 = vtos %v473
  %v476 = vlaneseq
  %v477 = vshrl.u32 %v476, 7
  %v478 = vsub.s32 0, %v477
  %v479 = vrot.slane %v415, %v478
  %480 = vrot.lane.b32.xlu0 %v479, 64
  %v481 = vpop.permute.xlu0 %480
  %v483 = vsel %vm326, %v481, 0.0
  %484 = vadd.xlane.f32.xlu0 %v483
  %v485 = vpop.xlane.xlu0 %484
  %v486 = vrot.slane %v485, 4
  %v487 = vadd.f32 %v485, %v486
  %v488 = vrot.slane %v487, 2
  %v489 = vadd.f32 %v487, %v488
  %v490 = vrot.slane %v489, 1
  %v491 = vadd.f32 %v489, %v490
  %s492 = vtos %v491
  %s493 = sadd.f32 %s474, %s492
  %s494 = smax.f32 %s493, 1e-12
  %v495 = vstv %s494
  %v496 = vrcp.pop %v495
  %s497 = vtos %v496
  %s498 = smul.f32 %s464, %s497
  %s499 = smax.f32 %s347, 1e-12
  %v500 = vstv %s499
  %v501 = vrcp.pop %v500
  %s502 = vtos %v501
  %s503 = smul.f32 %s464, %s502
  %505 = vset.pattern.permute.xlu0 32
  %506 = vperm.xlu0 %505, %v159
  %v507 = vpop.permute.xlu0 %506
  %510 = vset.pattern.permute.xlu0 32
  %511 = vperm.xlu0 %510, %v164
  %v512 = vpop.permute.xlu0 %511
  %515 = vset.pattern.permute.xlu0 32
  %516 = vperm.xlu0 %515, %v169
  %v517 = vpop.permute.xlu0 %516
  %520 = vset.pattern.permute.xlu0 32
  %521 = vperm.xlu0 %520, %v174
  %v522 = vpop.permute.xlu0 %521
  %v524 = vlaneseq
  %v525 = vshrl.u32 %v524, 7
  %v526 = vsub.s32 0, %v525
  %v527 = vrot.slane %v296, %v526
  %v528 = vsub.f32 %v507, %v527
  %v529 = vsub.f32 %v512, %v527
  %v530 = vsub.f32 %v517, %v527
  %v531 = vsub.f32 %v522, %v527
  %v532 = vmul.f32 %v528, %v528
  %v533 = vmul.f32 %v529, %v529
  %v534 = vmul.f32 %v530, %v530
  %v535 = vmul.f32 %v531, %v531
  %v536 = vadd.f32 %v532, 0.0
  %v537 = vadd.f32 %v533, 0.0
  %v538 = vadd.f32 %v534, 0.0
  %v539 = vadd.f32 %v535, 0.0
  %540 = vset.pattern.permute.xlu0 33
  %541 = vperm.xlu0 %540, %v159
  %v542 = vpop.permute.xlu0 %541
  %544 = vset.pattern.permute.xlu0 33
  %545 = vperm.xlu0 %544, %v164
  %v546 = vpop.permute.xlu0 %545
  %548 = vset.pattern.permute.xlu0 33
  %549 = vperm.xlu0 %548, %v169
  %v550 = vpop.permute.xlu0 %549
  %552 = vset.pattern.permute.xlu0 33
  %553 = vperm.xlu0 %552, %v174
  %v554 = vpop.permute.xlu0 %553
  %v556 = vlaneseq
  %v557 = vshrl.u32 %v556, 7
  %v558 = vsub.s32 1, %v557
  %v559 = vrot.slane %v296, %v558
  %v560 = vsub.f32 %v542, %v559
  %v561 = vsub.f32 %v546, %v559
  %v562 = vsub.f32 %v550, %v559
  %v563 = vsub.f32 %v554, %v559
  %v564 = vmul.f32 %v560, %v560
  %v565 = vmul.f32 %v561, %v561
  %v566 = vmul.f32 %v562, %v562
  %v567 = vmul.f32 %v563, %v563
  %v568 = vadd.f32 %v536, %v564
  %v569 = vadd.f32 %v537, %v565
  %v570 = vadd.f32 %v538, %v566
  %v571 = vadd.f32 %v539, %v567
  %572 = vset.pattern.permute.xlu0 34
  %573 = vperm.xlu0 %572, %v159
  %v574 = vpop.permute.xlu0 %573
  %576 = vset.pattern.permute.xlu0 34
  %577 = vperm.xlu0 %576, %v164
  %v578 = vpop.permute.xlu0 %577
  %580 = vset.pattern.permute.xlu0 34
  %581 = vperm.xlu0 %580, %v169
  %v582 = vpop.permute.xlu0 %581
  %584 = vset.pattern.permute.xlu0 34
  %585 = vperm.xlu0 %584, %v174
  %v586 = vpop.permute.xlu0 %585
  %v588 = vlaneseq
  %v589 = vshrl.u32 %v588, 7
  %v590 = vsub.s32 2, %v589
  %v591 = vrot.slane %v296, %v590
  %v592 = vsub.f32 %v574, %v591
  %v593 = vsub.f32 %v578, %v591
  %v594 = vsub.f32 %v582, %v591
  %v595 = vsub.f32 %v586, %v591
  %v596 = vmul.f32 %v592, %v592
  %v597 = vmul.f32 %v593, %v593
  %v598 = vmul.f32 %v594, %v594
  %v599 = vmul.f32 %v595, %v595
  %v600 = vadd.f32 %v568, %v596
  %v601 = vadd.f32 %v569, %v597
  %v602 = vadd.f32 %v570, %v598
  %v603 = vadd.f32 %v571, %v599
  %vm604 = vcmask 261120
  %v605 = vsel %vm604, %v159, 0
  %v607 = vsel %vm604, %v164, 0
  %v609 = vsel %vm604, %v169, 0
  %v611 = vsel %vm604, %v174, 0
  %613 = vmatprep.subr.mxu0 0.0
  %614 = vmatpush1.msra.mxu0 %v276
  %615 = vmatprep.subr.mxu0 0.0
  %616 = vmatpush1.msra.mxu0 %v281
  %617 = vmatprep.subr.mxu0 0.0
  %618 = vmatpush1.msra.mxu0 %v286
  %619 = vmatprep.subr.mxu0 0.0
  %620 = vmatpush1.msra.mxu0 %v291
  %621 = vmatprep.subr.mxu0 0.0
  %622 = vmatpush1.msra.mxu0 0.0
  %623 = vmatprep.subr.mxu0 0.0
  %624 = vmatpush1.msra.mxu0 0.0
  %625 = vmatprep.subr.mxu0 0.0
  %626 = vmatpush1.msra.mxu0 0.0
  %627 = vmatprep.subr.mxu0 0.0
  %628 = vmatpush1.msra.mxu0 0.0
  %629 = vmatprep.subr.mxu0 0.0
  %630 = vmatpush1.msra.mxu0 0.0
  %631 = vmatprep.subr.mxu0 0.0
  %632 = vmatpush1.msra.mxu0 0.0
  %633 = vmatprep.subr.mxu0 0.0
  %634 = vmatpush1.msra.mxu0 0.0
  %635 = vmatprep.subr.mxu0 0.0
  %636 = vmatpush1.msra.mxu0 0.0
  %637 = vmatprep.subr.mxu0 0.0
  %638 = vmatpush1.msra.mxu0 0.0
  %639 = vmatprep.subr.mxu0 0.0
  %640 = vmatpush1.msra.mxu0 0.0
  %641 = vmatprep.subr.mxu0 0.0
  %642 = vmatpush1.msra.mxu0 0.0
  %643 = vmatprep.subr.mxu0 0.0
  %644 = vmatpush1.msra.mxu0 0.0
  %645 = vmatprep.subr.mxu0 0.0
  %646 = vmatpush1.msra.mxu0 0.0
  %647 = vmatprep.subr.mxu0 0.0
  %648 = vmatpush1.msra.mxu0 0.0
  %649 = vmatprep.subr.mxu0 0.0
  %650 = vmatpush1.msra.mxu0 0.0
  %651 = vmatprep.subr.mxu0 0.0
  %652 = vmatpush1.msra.mxu0 0.0
  %653 = vmatprep.subr.mxu0 0.0
  %654 = vmatpush1.msra.mxu0 0.0
  %655 = vmatprep.subr.mxu0 0.0
  %656 = vmatpush1.msra.mxu0 0.0
  %657 = vmatprep.subr.mxu0 0.0
  %658 = vmatpush1.msra.mxu0 0.0
  %659 = vmatprep.subr.mxu0 0.0
  %660 = vmatpush1.msra.mxu0 0.0
  %661 = vmatprep.subr.mxu0 0.0
  %662 = vmatpush1.msra.mxu0 0.0
  %663 = vmatprep.subr.mxu0 0.0
  %664 = vmatpush1.msra.mxu0 0.0
  %665 = vmatprep.subr.mxu0 0.0
  %666 = vmatpush1.msra.mxu0 0.0
  %667 = vmatprep.subr.mxu0 0.0
  %668 = vmatpush1.msra.mxu0 0.0
  %669 = vmatprep.subr.mxu0 0.0
  %670 = vmatpush1.msra.mxu0 0.0
  %671 = vmatprep.subr.mxu0 0.0
  %672 = vmatpush1.msra.mxu0 0.0
  %673 = vmatprep.subr.mxu0 0.0
  %674 = vmatpush1.msra.mxu0 0.0
  %675 = vmatprep.subr.mxu0 0.0
  %676 = vmatpush1.msra.mxu0 0.0
  %677 = vmatprep.mubr.f32.mxu0 0.0
  %678 = vmatmul.mubr.f32.gmra.mrb[0].mxu0 %v605
  %v679 = vpop.f32.mrb[0].mxu0
  %v680 = vadd.f32 0.0, %v679
  %v681 = vpop.f32.mrb[0].mxu0
  %682 = vmatprep.mubr.f32.mxu0 0.0
  %683 = vmatmul.mubr.f32.gmra.mrb[0].mxu0 %v607
  %v684 = vpop.f32.mrb[0].mxu0
  %v685 = vadd.f32 0.0, %v684
  %v686 = vpop.f32.mrb[0].mxu0
  %687 = vmatprep.mubr.f32.mxu0 0.0
  %688 = vmatmul.mubr.f32.gmra.mrb[0].mxu0 %v609
  %v689 = vpop.f32.mrb[0].mxu0
  %v690 = vadd.f32 0.0, %v689
  %v691 = vpop.f32.mrb[0].mxu0
  %692 = vmatprep.mubr.f32.mxu0 0.0
  %693 = vmatmul.mubr.f32.gmra.mrb[0].mxu0 %v611
  %v694 = vpop.f32.mrb[0].mxu0
  %v695 = vadd.f32 0.0, %v694
  %v696 = vpop.f32.mrb[0].mxu0
  %697 = vdwg.mxu0
  %v698 = vmul.f32 %v680, 2.0
  %v699 = vmul.f32 %v685, 2.0
  %v700 = vmul.f32 %v690, 2.0
  %v701 = vmul.f32 %v695, 2.0
  %v702 = vsub.f32 2.0, %v698
  %v703 = vsub.f32 2.0, %v699
  %v704 = vsub.f32 2.0, %v700
  %v705 = vsub.f32 2.0, %v701
  %v706 = vmax.f32 %v702, 1e-12
  %v707 = vmax.f32 %v703, 1e-12
  %v708 = vmax.f32 %v704, 1e-12
  %v709 = vmax.f32 %v705, 1e-12
  %v710 = vrsqrt.pop %v706
  %v711 = vmul.f32 %v706, %v710
  %vm712 = vcmp.eq.f32.partialorder %v706, inf
  %v713 = vsel %vm712, %v706, %v711
  %vm714 = vcmp.eq.f32.partialorder %v706, 0.0
  %v715 = vand.u32 %v706, 2147483648
  %v716 = vsel %vm714, %v715, %v713
  %v717 = vrsqrt.pop %v707
  %v718 = vmul.f32 %v707, %v717
  %vm719 = vcmp.eq.f32.partialorder %v707, inf
  %v720 = vsel %vm719, %v707, %v718
  %vm721 = vcmp.eq.f32.partialorder %v707, 0.0
  %v722 = vand.u32 %v707, 2147483648
  %v723 = vsel %vm721, %v722, %v720
  %v724 = vrsqrt.pop %v708
  %v725 = vmul.f32 %v708, %v724
  %vm726 = vcmp.eq.f32.partialorder %v708, inf
  %v727 = vsel %vm726, %v708, %v725
  %vm728 = vcmp.eq.f32.partialorder %v708, 0.0
  %v729 = vand.u32 %v708, 2147483648
  %v730 = vsel %vm728, %v729, %v727
  %v731 = vrsqrt.pop %v709
  %v732 = vmul.f32 %v709, %v731
  %vm733 = vcmp.eq.f32.partialorder %v709, inf
  %v734 = vsel %vm733, %v709, %v732
  %vm735 = vcmp.eq.f32.partialorder %v709, 0.0
  %v736 = vand.u32 %v709, 2147483648
  %v737 = vsel %vm735, %v736, %v734
  %v738 = vsel %vm604, %v680, -inf
  %739 = vmax.xlane.f32.xlu0 %v738
  %v740 = vpop.xlane.xlu0 %739
  %v741 = vsel %vm604, %v685, -inf
  %742 = vmax.xlane.f32.xlu0 %v741
  %v743 = vpop.xlane.xlu0 %742
  %v744 = vsel %vm604, %v690, -inf
  %745 = vmax.xlane.f32.xlu0 %v744
  %v746 = vpop.xlane.xlu0 %745
  %v747 = vsel %vm604, %v695, -inf
  %748 = vmax.xlane.f32.xlu0 %v747
  %v749 = vpop.xlane.xlu0 %748
  %vm750 = vcmp.ge.f32.partialorder %v680, %v740
  %vm751 = vcmp.ge.f32.partialorder %v685, %v743
  %vm752 = vcmp.ge.f32.partialorder %v690, %v746
  %vm753 = vcmp.ge.f32.partialorder %v695, %v749
  %v754 = vsel %vm750, %v600, 1e+30
  %v755 = vsel %vm751, %v601, 1e+30
  %v756 = vsel %vm752, %v602, 1e+30
  %v757 = vsel %vm753, %v603, 1e+30
  %v758 = vsel %vm604, %v754, inf
  %759 = vmin.xlane.f32.xlu0 %v758
  %v760 = vpop.xlane.xlu0 %759
  %v761 = vsel %vm604, %v755, inf
  %762 = vmin.xlane.f32.xlu0 %v761
  %v763 = vpop.xlane.xlu0 %762
  %v764 = vsel %vm604, %v756, inf
  %765 = vmin.xlane.f32.xlu0 %v764
  %v766 = vpop.xlane.xlu0 %765
  %v767 = vsel %vm604, %v757, inf
  %768 = vmin.xlane.f32.xlu0 %v767
  %v769 = vpop.xlane.xlu0 %768
  %v770 = vmax.f32 %v738, %v741
  %v771 = vmax.f32 %v744, %v747
  %v772 = vmax.f32 %v770, %v771
  %v773 = vrot.slane %v772, 4
  %v774 = vmax.f32 %v772, %v773
  %v775 = vrot.slane %v774, 2
  %v776 = vmax.f32 %v774, %v775
  %v777 = vrot.slane %v776, 1
  %v778 = vmax.f32 %v776, %v777
  %vm779 = vcmp.ge.f32.partialorder %v680, %v778
  %vm780 = vcmp.ge.f32.partialorder %v685, %v778
  %vm781 = vcmp.ge.f32.partialorder %v690, %v778
  %vm782 = vcmp.ge.f32.partialorder %v695, %v778
  %v783 = vsel %vm779, %v600, 1e+30
  %v784 = vsel %vm780, %v601, 1e+30
  %v785 = vsel %vm781, %v602, 1e+30
  %v786 = vsel %vm782, %v603, 1e+30
  %v787 = vsel %vm604, %v783, inf
  %v788 = vsel %vm604, %v784, inf
  %v789 = vsel %vm604, %v785, inf
  %v790 = vsel %vm604, %v786, inf
  %v791 = vmin.f32 %v787, %v788
  %v792 = vmin.f32 %v789, %v790
  %v793 = vmin.f32 %v791, %v792
  %v794 = vrot.slane %v793, 4
  %v795 = vmin.f32 %v793, %v794
  %v796 = vrot.slane %v795, 2
  %v797 = vmin.f32 %v795, %v796
  %v798 = vrot.slane %v797, 1
  %v799 = vmin.f32 %v797, %v798
  %vm800 = vcmp.lt.f32.partialorder %v760, 0.0025
  %vm801 = vcmp.lt.f32.partialorder %v763, 0.0025
  %vm802 = vcmp.lt.f32.partialorder %v766, 0.0025
  %vm803 = vcmp.lt.f32.partialorder %v769, 0.0025
  %v804 = vsel %vm800, 1, 0
  %v805 = vsel %vm801, 1, 0
  %v806 = vsel %vm802, 1, 0
  %v807 = vsel %vm803, 1, 0
  %v808 = vcvt.s32.f32 %v804
  %v809 = vcvt.s32.f32 %v805
  %v810 = vcvt.s32.f32 %v806
  %v811 = vcvt.s32.f32 %v807
  %vm812 = vcmp.lt.f32.partialorder %v799, 0.0025
  %v813 = vsel %vm812, 1, 0
  %v814 = vcvt.s32.f32 %v813
  %vm815 = vcmask 7168
  %v816 = vsel %vm815, %v808, 0.0
  %v817 = vsel %vm815, %v809, 0.0
  %v818 = vadd.f32 %v816, %v817
  %v819 = vsel %vm815, %v810, 0.0
  %v820 = vadd.f32 %v818, %v819
  %v821 = vsel %vm815, %v811, 0.0
  %v822 = vadd.f32 %v820, %v821
  %823 = vadd.xlane.f32.xlu0 %v822
  %v824 = vpop.xlane.xlu0 %823
  %v825 = vrot.slane %v824, 4
  %v826 = vadd.f32 %v824, %v825
  %v827 = vrot.slane %v826, 2
  %v828 = vadd.f32 %v826, %v827
  %v829 = vrot.slane %v828, 1
  %v830 = vadd.f32 %v828, %v829
  %s831 = vtos %v830
  %vm832 = vcmask 253952
  %v833 = vsel %vm832, %v814, 0.0
  %834 = vadd.xlane.f32.xlu0 %v833
  %v835 = vpop.xlane.xlu0 %834
  %v836 = vrot.slane %v835, 4
  %v837 = vadd.f32 %v835, %v836
  %v838 = vrot.slane %v837, 2
  %v839 = vadd.f32 %v837, %v838
  %v840 = vrot.slane %v839, 1
  %v841 = vadd.f32 %v839, %v840
  %s842 = vtos %v841
  %s843 = sadd.f32 %s831, %s842
  %s844 = smul.f32 %s843, 0.015625
  %s845 = ssub.f32 1.0, %s844
  %vm846 = vcmp.ge.f32.partialorder %v808, 0.5
  %vm847 = vcmp.ge.f32.partialorder %v809, 0.5
  %vm848 = vcmp.ge.f32.partialorder %v810, 0.5
  %vm849 = vcmp.ge.f32.partialorder %v811, 0.5
  %v850 = vstv %s845
  %v851 = vstv %s844
  %v852 = vsel %vm846, %v850, %v851
  %v853 = vsel %vm847, %v850, %v851
  %v854 = vsel %vm848, %v850, %v851
  %v855 = vsel %vm849, %v850, %v851
  %v856 = vlog2.pop %v159
  %v857 = vmul.f32 %v856, 0.6931472
  %v858 = vlog2.pop %v164
  %v859 = vmul.f32 %v858, 0.6931472
  %v860 = vlog2.pop %v169
  %v861 = vmul.f32 %v860, 0.6931472
  %v862 = vlog2.pop %v174
  %v863 = vmul.f32 %v862, 0.6931472
  %v864 = vmax.f32 %v857, -100.0
  %v865 = vmax.f32 %v859, -100.0
  %v866 = vmax.f32 %v861, -100.0
  %v867 = vmax.f32 %v863, -100.0
  %v868 = vsub.f32 1.0, %v159
  %v869 = vsub.f32 1.0, %v164
  %v870 = vsub.f32 1.0, %v169
  %v871 = vsub.f32 1.0, %v174
  %v872 = vlog2.pop %v868
  %v873 = vmul.f32 %v872, 0.6931472
  %v874 = vlog2.pop %v869
  %v875 = vmul.f32 %v874, 0.6931472
  %v876 = vlog2.pop %v870
  %v877 = vmul.f32 %v876, 0.6931472
  %v878 = vlog2.pop %v871
  %v879 = vmul.f32 %v878, 0.6931472
  %v880 = vmax.f32 %v873, -100.0
  %v881 = vmax.f32 %v875, -100.0
  %v882 = vmax.f32 %v877, -100.0
  %v883 = vmax.f32 %v879, -100.0
  %v884 = vmul.f32 %v808, %v864
  %v885 = vmul.f32 %v809, %v865
  %v886 = vmul.f32 %v810, %v866
  %v887 = vmul.f32 %v811, %v867
  %v888 = vsub.f32 1.0, %v808
  %v889 = vsub.f32 1.0, %v809
  %v890 = vsub.f32 1.0, %v810
  %v891 = vsub.f32 1.0, %v811
  %v892 = vmul.f32 %v888, %v880
  %v893 = vmul.f32 %v889, %v881
  %v894 = vmul.f32 %v890, %v882
  %v895 = vmul.f32 %v891, %v883
  %v896 = vadd.f32 %v884, %v892
  %v897 = vadd.f32 %v885, %v893
  %v898 = vadd.f32 %v886, %v894
  %v899 = vadd.f32 %v887, %v895
  %v900 = vsub.f32 0.0, %v896
  %v901 = vsub.f32 0.0, %v897
  %v902 = vsub.f32 0.0, %v898
  %v903 = vsub.f32 0.0, %v899
  %v904 = vmul.f32 %v852, %v900
  %v905 = vmul.f32 %v853, %v901
  %v906 = vmul.f32 %v854, %v902
  %v907 = vmul.f32 %v855, %v903
  %912 = vrot.lane.b32.xlu0 %v904, 93
  %v913 = vpop.permute.xlu0 %912
  %914 = vrot.lane.b32.xlu0 %v905, 93
  %v915 = vpop.permute.xlu0 %914
  %916 = vrot.lane.b32.xlu0 %v906, 93
  %v917 = vpop.permute.xlu0 %916
  %918 = vrot.lane.b32.xlu0 %v907, 93
  %v919 = vpop.permute.xlu0 %918
  %v924 = vsel %vm815, %v913, 0.0
  %v925 = vsel %vm815, %v915, 0.0
  %v926 = vadd.f32 %v924, %v925
  %v927 = vsel %vm815, %v917, 0.0
  %v928 = vadd.f32 %v926, %v927
  %v929 = vsel %vm815, %v919, 0.0
  %v930 = vadd.f32 %v928, %v929
  %931 = vadd.xlane.f32.xlu0 %v930
  %v932 = vpop.xlane.xlu0 %931
  %v933 = vrot.slane %v932, 4
  %v934 = vadd.f32 %v932, %v933
  %v935 = vrot.slane %v934, 2
  %v936 = vadd.f32 %v934, %v935
  %v937 = vrot.slane %v936, 1
  %v938 = vadd.f32 %v936, %v937
  %s939 = vtos %v938
  %vm940 = vcmp.ge.f32.partialorder %v814, 0.5
  %v941 = vsel %vm940, %v850, %v851
  %v942 = vlog2.pop %v296
  %v943 = vmul.f32 %v942, 0.6931472
  %v944 = vmax.f32 %v943, -100.0
  %v945 = vsub.f32 1.0, %v296
  %v946 = vlog2.pop %v945
  %v947 = vmul.f32 %v946, 0.6931472
  %v948 = vmax.f32 %v947, -100.0
  %v949 = vmul.f32 %v814, %v944
  %v950 = vsub.f32 1.0, %v814
  %v951 = vmul.f32 %v950, %v948
  %v952 = vadd.f32 %v949, %v951
  %v953 = vsub.f32 0.0, %v952
  %v954 = vmul.f32 %v941, %v953
  %v956 = vrot.slane %v954, 3
  %v958 = vsel %vm832, %v956, 0.0
  %959 = vadd.xlane.f32.xlu0 %v958
  %v960 = vpop.xlane.xlu0 %959
  %v961 = vrot.slane %v960, 4
  %v962 = vadd.f32 %v960, %v961
  %v963 = vrot.slane %v962, 2
  %v964 = vadd.f32 %v962, %v963
  %v965 = vrot.slane %v964, 1
  %v966 = vadd.f32 %v964, %v965
  %s967 = vtos %v966
  %s968 = sadd.f32 %s939, %s967
  %s969 = smul.f32 %s968, 0.015625
  %vm970 = vcmp.ge.f32.partialorder %v159, 0.5
  %vm971 = vcmp.ge.f32.partialorder %v164, 0.5
  %vm972 = vcmp.ge.f32.partialorder %v169, 0.5
  %vm973 = vcmp.ge.f32.partialorder %v174, 0.5
  %v974 = vsel %vm970, 1, 0
  %v975 = vsel %vm971, 1, 0
  %v976 = vsel %vm972, 1, 0
  %v977 = vsel %vm973, 1, 0
  %v978 = vcvt.s32.f32 %v974
  %v979 = vcvt.s32.f32 %v975
  %v980 = vcvt.s32.f32 %v976
  %v981 = vcvt.s32.f32 %v977
  %vm982 = vcmp.ge.f32.partialorder %v296, 0.5
  %v983 = vsel %vm982, 1, 0
  %v984 = vcvt.s32.f32 %v983
  %v985 = vmul.f32 %v978, %v808
  %v986 = vmul.f32 %v979, %v809
  %v987 = vmul.f32 %v980, %v810
  %v988 = vmul.f32 %v981, %v811
  %993 = vrot.lane.b32.xlu0 %v985, 93
  %v994 = vpop.permute.xlu0 %993
  %995 = vrot.lane.b32.xlu0 %v986, 93
  %v996 = vpop.permute.xlu0 %995
  %997 = vrot.lane.b32.xlu0 %v987, 93
  %v998 = vpop.permute.xlu0 %997
  %999 = vrot.lane.b32.xlu0 %v988, 93
  %v1000 = vpop.permute.xlu0 %999
  %v1005 = vsel %vm815, %v994, 0.0
  %v1006 = vsel %vm815, %v996, 0.0
  %v1007 = vadd.f32 %v1005, %v1006
  %v1008 = vsel %vm815, %v998, 0.0
  %v1009 = vadd.f32 %v1007, %v1008
  %v1010 = vsel %vm815, %v1000, 0.0
  %v1011 = vadd.f32 %v1009, %v1010
  %1012 = vadd.xlane.f32.xlu0 %v1011
  %v1013 = vpop.xlane.xlu0 %1012
  %v1014 = vrot.slane %v1013, 4
  %v1015 = vadd.f32 %v1013, %v1014
  %v1016 = vrot.slane %v1015, 2
  %v1017 = vadd.f32 %v1015, %v1016
  %v1018 = vrot.slane %v1017, 1
  %v1019 = vadd.f32 %v1017, %v1018
  %s1020 = vtos %v1019
  %v1021 = vmul.f32 %v984, %v814
  %v1023 = vrot.slane %v1021, 3
  %v1025 = vsel %vm832, %v1023, 0.0
  %1026 = vadd.xlane.f32.xlu0 %v1025
  %v1027 = vpop.xlane.xlu0 %1026
  %v1028 = vrot.slane %v1027, 4
  %v1029 = vadd.f32 %v1027, %v1028
  %v1030 = vrot.slane %v1029, 2
  %v1031 = vadd.f32 %v1029, %v1030
  %v1032 = vrot.slane %v1031, 1
  %v1033 = vadd.f32 %v1031, %v1032
  %s1034 = vtos %v1033
  %s1035 = sadd.f32 %s1020, %s1034
  %1040 = vrot.lane.b32.xlu0 %v978, 93
  %v1041 = vpop.permute.xlu0 %1040
  %1042 = vrot.lane.b32.xlu0 %v979, 93
  %v1043 = vpop.permute.xlu0 %1042
  %1044 = vrot.lane.b32.xlu0 %v980, 93
  %v1045 = vpop.permute.xlu0 %1044
  %1046 = vrot.lane.b32.xlu0 %v981, 93
  %v1047 = vpop.permute.xlu0 %1046
  %v1052 = vsel %vm815, %v1041, 0.0
  %v1053 = vsel %vm815, %v1043, 0.0
  %v1054 = vadd.f32 %v1052, %v1053
  %v1055 = vsel %vm815, %v1045, 0.0
  %v1056 = vadd.f32 %v1054, %v1055
  %v1057 = vsel %vm815, %v1047, 0.0
  %v1058 = vadd.f32 %v1056, %v1057
  %1059 = vadd.xlane.f32.xlu0 %v1058
  %v1060 = vpop.xlane.xlu0 %1059
  %v1061 = vrot.slane %v1060, 4
  %v1062 = vadd.f32 %v1060, %v1061
  %v1063 = vrot.slane %v1062, 2
  %v1064 = vadd.f32 %v1062, %v1063
  %v1065 = vrot.slane %v1064, 1
  %v1066 = vadd.f32 %v1064, %v1065
  %s1067 = vtos %v1066
  %v1069 = vrot.slane %v984, 3
  %v1071 = vsel %vm832, %v1069, 0.0
  %1072 = vadd.xlane.f32.xlu0 %v1071
  %v1073 = vpop.xlane.xlu0 %1072
  %v1074 = vrot.slane %v1073, 4
  %v1075 = vadd.f32 %v1073, %v1074
  %v1076 = vrot.slane %v1075, 2
  %v1077 = vadd.f32 %v1075, %v1076
  %v1078 = vrot.slane %v1077, 1
  %v1079 = vadd.f32 %v1077, %v1078
  %s1080 = vtos %v1079
  %s1081 = sadd.f32 %s1067, %s1080
  %s1082 = smax.f32 %s1081, 1e-12
  %v1083 = vstv %s1082
  %v1084 = vrcp.pop %v1083
  %s1085 = vtos %v1084
  %s1086 = smul.f32 %s1035, %s1085
  %s1087 = smax.f32 %s843, 1e-12
  %v1088 = vstv %s1087
  %v1089 = vrcp.pop %v1088
  %s1090 = vtos %v1089
  %s1091 = smul.f32 %s1035, %s1090
  %v1092 = vsel %vm604, %v600, inf
  %1093 = vmin.xlane.f32.xlu0 %v1092
  %v1094 = vpop.xlane.xlu0 %1093
  %v1095 = vsel %vm604, %v601, inf
  %1096 = vmin.xlane.f32.xlu0 %v1095
  %v1097 = vpop.xlane.xlu0 %1096
  %v1098 = vsel %vm604, %v602, inf
  %1099 = vmin.xlane.f32.xlu0 %v1098
  %v1100 = vpop.xlane.xlu0 %1099
  %v1101 = vsel %vm604, %v603, inf
  %1102 = vmin.xlane.f32.xlu0 %v1101
  %v1103 = vpop.xlane.xlu0 %1102
  %v1104 = vsel %vm604, %v600, -inf
  %1105 = vmax.xlane.f32.xlu0 %v1104
  %v1106 = vpop.xlane.xlu0 %1105
  %v1107 = vsel %vm604, %v601, -inf
  %1108 = vmax.xlane.f32.xlu0 %v1107
  %v1109 = vpop.xlane.xlu0 %1108
  %v1110 = vsel %vm604, %v602, -inf
  %1111 = vmax.xlane.f32.xlu0 %v1110
  %v1112 = vpop.xlane.xlu0 %1111
  %v1113 = vsel %vm604, %v603, -inf
  %1114 = vmax.xlane.f32.xlu0 %v1113
  %v1115 = vpop.xlane.xlu0 %1114
  %v1116 = vmin.f32 %v1092, %v1095
  %v1117 = vmin.f32 %v1098, %v1101
  %v1118 = vmin.f32 %v1116, %v1117
  %v1119 = vrot.slane %v1118, 4
  %v1120 = vmin.f32 %v1118, %v1119
  %v1121 = vrot.slane %v1120, 2
  %v1122 = vmin.f32 %v1120, %v1121
  %v1123 = vrot.slane %v1122, 1
  %v1124 = vmin.f32 %v1122, %v1123
  %v1125 = vmax.f32 %v1104, %v1107
  %v1126 = vmax.f32 %v1110, %v1113
  %v1127 = vmax.f32 %v1125, %v1126
  %v1128 = vrot.slane %v1127, 4
  %v1129 = vmax.f32 %v1127, %v1128
  %v1130 = vrot.slane %v1129, 2
  %v1131 = vmax.f32 %v1129, %v1130
  %v1132 = vrot.slane %v1131, 1
  %v1133 = vmax.f32 %v1131, %v1132
  %vm1134 = vcmp.lt.f32.partialorder %v1094, 0.00140625
  %vm1135 = vcmp.lt.f32.partialorder %v1097, 0.00140625
  %vm1136 = vcmp.lt.f32.partialorder %v1100, 0.00140625
  %vm1137 = vcmp.lt.f32.partialorder %v1103, 0.00140625
  %vm1138 = vcmp.gt.f32.partialorder %v1106, 0.01
  %vm1139 = vcmp.gt.f32.partialorder %v1109, 0.01
  %vm1140 = vcmp.gt.f32.partialorder %v1112, 0.01
  %vm1141 = vcmp.gt.f32.partialorder %v1115, 0.01
  %vm1142 = vmand %vm1134, %vm1138
  %vm1143 = vmand %vm1135, %vm1139
  %vm1144 = vmand %vm1136, %vm1140
  %vm1145 = vmand %vm1137, %vm1141
  %v1146 = vsel %vm1142, 1, 0
  %v1147 = vsel %vm1143, 1, 0
  %v1148 = vsel %vm1144, 1, 0
  %v1149 = vsel %vm1145, 1, 0
  %v1150 = vcvt.s32.f32 %v1146
  %v1151 = vcvt.s32.f32 %v1147
  %v1152 = vcvt.s32.f32 %v1148
  %v1153 = vcvt.s32.f32 %v1149
  %vm1154 = vcmp.lt.f32.partialorder %v1124, 0.00140625
  %vm1155 = vcmp.gt.f32.partialorder %v1133, 0.01
  %vm1156 = vmand %vm1154, %vm1155
  %v1157 = vsel %vm1156, 1, 0
  %v1158 = vcvt.s32.f32 %v1157
  %vm1159 = vcmp.lt.f32.partialorder %v600, 0.00140625
  %vm1160 = vcmp.lt.f32.partialorder %v601, 0.00140625
  %vm1161 = vcmp.lt.f32.partialorder %v602, 0.00140625
  %vm1162 = vcmp.lt.f32.partialorder %v603, 0.00140625
  %v1163 = vsub.f32 %v716, 0.1
  %v1164 = vsub.f32 %v723, 0.1
  %v1165 = vsub.f32 %v730, 0.1
  %v1166 = vsub.f32 %v737, 0.1
  %v1167 = vmax.f32 %v1163, 0.0
  %v1168 = vmax.f32 %v1164, 0.0
  %v1169 = vmax.f32 %v1165, 0.0
  %v1170 = vmax.f32 %v1166, 0.0
  %v1171 = vsel %vm1159, %v1167, 0.0
  %v1172 = vsel %vm1160, %v1168, 0.0
  %v1173 = vsel %vm1161, %v1169, 0.0
  %v1174 = vsel %vm1162, %v1170, 0.0
  %vm1175 = vcmp.gt.f32.partialorder %v600, 0.01
  %vm1176 = vcmp.gt.f32.partialorder %v601, 0.01
  %vm1177 = vcmp.gt.f32.partialorder %v602, 0.01
  %vm1178 = vcmp.gt.f32.partialorder %v603, 0.01
  %v1179 = vsub.f32 1.4, %v716
  %v1180 = vsub.f32 1.4, %v723
  %v1181 = vsub.f32 1.4, %v730
  %v1182 = vsub.f32 1.4, %v737
  %v1183 = vmax.f32 %v1179, 0.0
  %v1184 = vmax.f32 %v1180, 0.0
  %v1185 = vmax.f32 %v1181, 0.0
  %v1186 = vmax.f32 %v1182, 0.0
  %v1187 = vsel %vm1175, %v1183, 0.0
  %v1188 = vsel %vm1176, %v1184, 0.0
  %v1189 = vsel %vm1177, %v1185, 0.0
  %v1190 = vsel %vm1178, %v1186, 0.0
  %v1191 = vmul.f32 %v1163, 16.0
  %v1192 = vmul.f32 %v1164, 16.0
  %v1193 = vmul.f32 %v1165, 16.0
  %v1194 = vmul.f32 %v1166, 16.0
  %v1195 = vmul.f32 %v1191, %v1171
  %v1196 = vmul.f32 %v1192, %v1172
  %v1197 = vmul.f32 %v1193, %v1173
  %v1198 = vmul.f32 %v1194, %v1174
  %v1199 = vmul.f32 %v1179, 16.0
  %v1200 = vmul.f32 %v1180, 16.0
  %v1201 = vmul.f32 %v1181, 16.0
  %v1202 = vmul.f32 %v1182, 16.0
  %v1203 = vmul.f32 %v1199, %v1187
  %v1204 = vmul.f32 %v1200, %v1188
  %v1205 = vmul.f32 %v1201, %v1189
  %v1206 = vmul.f32 %v1202, %v1190
  %v1207 = vsel %vm604, %v1195, -inf
  %1208 = vmax.xlane.f32.xlu0 %v1207
  %v1209 = vpop.xlane.xlu0 %1208
  %v1210 = vsel %vm604, %v1196, -inf
  %1211 = vmax.xlane.f32.xlu0 %v1210
  %v1212 = vpop.xlane.xlu0 %1211
  %v1213 = vsel %vm604, %v1197, -inf
  %1214 = vmax.xlane.f32.xlu0 %v1213
  %v1215 = vpop.xlane.xlu0 %1214
  %v1216 = vsel %vm604, %v1198, -inf
  %1217 = vmax.xlane.f32.xlu0 %v1216
  %v1218 = vpop.xlane.xlu0 %1217
  %v1219 = vsub.f32 %v1195, %v1209
  %v1220 = vsub.f32 %v1196, %v1212
  %v1221 = vsub.f32 %v1197, %v1215
  %v1222 = vsub.f32 %v1198, %v1218
  %v1223 = vmul.f32 %v1219, 1.442695
  %v1224 = vpow.pop %v1223
  %v1225 = vmul.f32 %v1220, 1.442695
  %v1226 = vpow.pop %v1225
  %v1227 = vmul.f32 %v1221, 1.442695
  %v1228 = vpow.pop %v1227
  %v1229 = vmul.f32 %v1222, 1.442695
  %v1230 = vpow.pop %v1229
  %v1231 = vsel %vm604, %v1224, 0.0
  %1232 = vadd.xlane.f32.xlu0 %v1231
  %v1233 = vpop.xlane.xlu0 %1232
  %v1234 = vsel %vm604, %v1226, 0.0
  %1235 = vadd.xlane.f32.xlu0 %v1234
  %v1236 = vpop.xlane.xlu0 %1235
  %v1237 = vsel %vm604, %v1228, 0.0
  %1238 = vadd.xlane.f32.xlu0 %v1237
  %v1239 = vpop.xlane.xlu0 %1238
  %v1240 = vsel %vm604, %v1230, 0.0
  %1241 = vadd.xlane.f32.xlu0 %v1240
  %v1242 = vpop.xlane.xlu0 %1241
  %v1243 = vlog2.pop %v1233
  %v1244 = vmul.f32 %v1243, 0.6931472
  %v1245 = vlog2.pop %v1236
  %v1246 = vmul.f32 %v1245, 0.6931472
  %v1247 = vlog2.pop %v1239
  %v1248 = vmul.f32 %v1247, 0.6931472
  %v1249 = vlog2.pop %v1242
  %v1250 = vmul.f32 %v1249, 0.6931472
  %v1251 = vadd.f32 %v1209, %v1244
  %v1252 = vadd.f32 %v1212, %v1246
  %v1253 = vadd.f32 %v1215, %v1248
  %v1254 = vadd.f32 %v1218, %v1250
  %v1255 = vsel %vm604, %v1203, -inf
  %1256 = vmax.xlane.f32.xlu0 %v1255
  %v1257 = vpop.xlane.xlu0 %1256
  %v1258 = vsel %vm604, %v1204, -inf
  %1259 = vmax.xlane.f32.xlu0 %v1258
  %v1260 = vpop.xlane.xlu0 %1259
  %v1261 = vsel %vm604, %v1205, -inf
  %1262 = vmax.xlane.f32.xlu0 %v1261
  %v1263 = vpop.xlane.xlu0 %1262
  %v1264 = vsel %vm604, %v1206, -inf
  %1265 = vmax.xlane.f32.xlu0 %v1264
  %v1266 = vpop.xlane.xlu0 %1265
  %v1267 = vsub.f32 %v1203, %v1257
  %v1268 = vsub.f32 %v1204, %v1260
  %v1269 = vsub.f32 %v1205, %v1263
  %v1270 = vsub.f32 %v1206, %v1266
  %v1271 = vmul.f32 %v1267, 1.442695
  %v1272 = vpow.pop %v1271
  %v1273 = vmul.f32 %v1268, 1.442695
  %v1274 = vpow.pop %v1273
  %v1275 = vmul.f32 %v1269, 1.442695
  %v1276 = vpow.pop %v1275
  %v1277 = vmul.f32 %v1270, 1.442695
  %v1278 = vpow.pop %v1277
  %v1279 = vsel %vm604, %v1272, 0.0
  %1280 = vadd.xlane.f32.xlu0 %v1279
  %v1281 = vpop.xlane.xlu0 %1280
  %v1282 = vsel %vm604, %v1274, 0.0
  %1283 = vadd.xlane.f32.xlu0 %v1282
  %v1284 = vpop.xlane.xlu0 %1283
  %v1285 = vsel %vm604, %v1276, 0.0
  %1286 = vadd.xlane.f32.xlu0 %v1285
  %v1287 = vpop.xlane.xlu0 %1286
  %v1288 = vsel %vm604, %v1278, 0.0
  %1289 = vadd.xlane.f32.xlu0 %v1288
  %v1290 = vpop.xlane.xlu0 %1289
  %v1291 = vlog2.pop %v1281
  %v1292 = vmul.f32 %v1291, 0.6931472
  %v1293 = vlog2.pop %v1284
  %v1294 = vmul.f32 %v1293, 0.6931472
  %v1295 = vlog2.pop %v1287
  %v1296 = vmul.f32 %v1295, 0.6931472
  %v1297 = vlog2.pop %v1290
  %v1298 = vmul.f32 %v1297, 0.6931472
  %v1299 = vadd.f32 %v1257, %v1292
  %v1300 = vadd.f32 %v1260, %v1294
  %v1301 = vadd.f32 %v1263, %v1296
  %v1302 = vadd.f32 %v1266, %v1298
  %v1303 = vadd.f32 %v1251, %v1299
  %v1304 = vadd.f32 %v1252, %v1300
  %v1305 = vadd.f32 %v1253, %v1301
  %v1306 = vadd.f32 %v1254, %v1302
  %vm1307 = vcmp.gt.f32.partialorder %v1303, 20.0
  %vm1308 = vcmp.gt.f32.partialorder %v1304, 20.0
  %vm1309 = vcmp.gt.f32.partialorder %v1305, 20.0
  %vm1310 = vcmp.gt.f32.partialorder %v1306, 20.0
  %v1311 = vmin.f32 %v1303, 20.0
  %v1312 = vmin.f32 %v1304, 20.0
  %v1313 = vmin.f32 %v1305, 20.0
  %v1314 = vmin.f32 %v1306, 20.0
  %v1315 = vmul.f32 %v1311, 1.442695
  %v1316 = vpow.pop %v1315
  %v1317 = vmul.f32 %v1312, 1.442695
  %v1318 = vpow.pop %v1317
  %v1319 = vmul.f32 %v1313, 1.442695
  %v1320 = vpow.pop %v1319
  %v1321 = vmul.f32 %v1314, 1.442695
  %v1322 = vpow.pop %v1321
  %v1323 = vadd.f32 %v1316, 1.0
  %v1324 = vlog2.pop %v1323
  %v1325 = vmul.f32 %v1324, 0.6931472
  %v1326 = vmul.f32 -0.5, %v1316
  %v1327 = vadd.f32 %v1326, 1.0
  %v1328 = vmul.f32 %v1327, %v1316
  %v1329 = vand.u32 2147483647, %v1316
  %vm1330 = vcmp.lt.f32.partialorder %v1329, 0.0004427343
  %v1331 = vsel %vm1330, %v1328, %v1325
  %v1332 = vadd.f32 %v1318, 1.0
  %v1333 = vlog2.pop %v1332
  %v1334 = vmul.f32 %v1333, 0.6931472
  %v1335 = vmul.f32 -0.5, %v1318
  %v1336 = vadd.f32 %v1335, 1.0
  %v1337 = vmul.f32 %v1336, %v1318
  %v1338 = vand.u32 2147483647, %v1318
  %vm1339 = vcmp.lt.f32.partialorder %v1338, 0.0004427343
  %v1340 = vsel %vm1339, %v1337, %v1334
  %v1341 = vadd.f32 %v1320, 1.0
  %v1342 = vlog2.pop %v1341
  %v1343 = vmul.f32 %v1342, 0.6931472
  %v1344 = vmul.f32 -0.5, %v1320
  %v1345 = vadd.f32 %v1344, 1.0
  %v1346 = vmul.f32 %v1345, %v1320
  %v1347 = vand.u32 2147483647, %v1320
  %vm1348 = vcmp.lt.f32.partialorder %v1347, 0.0004427343
  %v1349 = vsel %vm1348, %v1346, %v1343
  %v1350 = vadd.f32 %v1322, 1.0
  %v1351 = vlog2.pop %v1350
  %v1352 = vmul.f32 %v1351, 0.6931472
  %v1353 = vmul.f32 -0.5, %v1322
  %v1354 = vadd.f32 %v1353, 1.0
  %v1355 = vmul.f32 %v1354, %v1322
  %v1356 = vand.u32 2147483647, %v1322
  %vm1357 = vcmp.lt.f32.partialorder %v1356, 0.0004427343
  %v1358 = vsel %vm1357, %v1355, %v1352
  %v1359 = vsel %vm1307, %v1303, %v1331
  %v1360 = vsel %vm1308, %v1304, %v1340
  %v1361 = vsel %vm1309, %v1305, %v1349
  %v1362 = vsel %vm1310, %v1306, %v1358
  %v1363 = vmul.f32 %v1359, 0.0625
  %v1364 = vmul.f32 %v1360, 0.0625
  %v1365 = vmul.f32 %v1361, 0.0625
  %v1366 = vmul.f32 %v1362, 0.0625
  %v1367 = vmax.f32 %v1207, %v1210
  %v1368 = vmax.f32 %v1213, %v1216
  %v1369 = vmax.f32 %v1367, %v1368
  %v1370 = vrot.slane %v1369, 4
  %v1371 = vmax.f32 %v1369, %v1370
  %v1372 = vrot.slane %v1371, 2
  %v1373 = vmax.f32 %v1371, %v1372
  %v1374 = vrot.slane %v1373, 1
  %v1375 = vmax.f32 %v1373, %v1374
  %v1376 = vsub.f32 %v1195, %v1375
  %v1377 = vsub.f32 %v1196, %v1375
  %v1378 = vsub.f32 %v1197, %v1375
  %v1379 = vsub.f32 %v1198, %v1375
  %v1380 = vmul.f32 %v1376, 1.442695
  %v1381 = vpow.pop %v1380
  %v1382 = vmul.f32 %v1377, 1.442695
  %v1383 = vpow.pop %v1382
  %v1384 = vmul.f32 %v1378, 1.442695
  %v1385 = vpow.pop %v1384
  %v1386 = vmul.f32 %v1379, 1.442695
  %v1387 = vpow.pop %v1386
  %v1388 = vsel %vm604, %v1381, 0.0
  %v1389 = vsel %vm604, %v1383, 0.0
  %v1390 = vadd.f32 %v1388, %v1389
  %v1391 = vsel %vm604, %v1385, 0.0
  %v1392 = vadd.f32 %v1390, %v1391
  %v1393 = vsel %vm604, %v1387, 0.0
  %v1394 = vadd.f32 %v1392, %v1393
  %v1395 = vrot.slane %v1394, 4
  %v1396 = vadd.f32 %v1394, %v1395
  %v1397 = vrot.slane %v1396, 2
  %v1398 = vadd.f32 %v1396, %v1397
  %v1399 = vrot.slane %v1398, 1
  %v1400 = vadd.f32 %v1398, %v1399
  %v1401 = vlog2.pop %v1400
  %v1402 = vmul.f32 %v1401, 0.6931472
  %v1403 = vadd.f32 %v1375, %v1402
  %v1404 = vmax.f32 %v1255, %v1258
  %v1405 = vmax.f32 %v1261, %v1264
  %v1406 = vmax.f32 %v1404, %v1405
  %v1407 = vrot.slane %v1406, 4
  %v1408 = vmax.f32 %v1406, %v1407
  %v1409 = vrot.slane %v1408, 2
  %v1410 = vmax.f32 %v1408, %v1409
  %v1411 = vrot.slane %v1410, 1
  %v1412 = vmax.f32 %v1410, %v1411
  %v1413 = vsub.f32 %v1203, %v1412
  %v1414 = vsub.f32 %v1204, %v1412
  %v1415 = vsub.f32 %v1205, %v1412
  %v1416 = vsub.f32 %v1206, %v1412
  %v1417 = vmul.f32 %v1413, 1.442695
  %v1418 = vpow.pop %v1417
  %v1419 = vmul.f32 %v1414, 1.442695
  %v1420 = vpow.pop %v1419
  %v1421 = vmul.f32 %v1415, 1.442695
  %v1422 = vpow.pop %v1421
  %v1423 = vmul.f32 %v1416, 1.442695
  %v1424 = vpow.pop %v1423
  %v1425 = vsel %vm604, %v1418, 0.0
  %v1426 = vsel %vm604, %v1420, 0.0
  %v1427 = vadd.f32 %v1425, %v1426
  %v1428 = vsel %vm604, %v1422, 0.0
  %v1429 = vadd.f32 %v1427, %v1428
  %v1430 = vsel %vm604, %v1424, 0.0
  %v1431 = vadd.f32 %v1429, %v1430
  %v1432 = vrot.slane %v1431, 4
  %v1433 = vadd.f32 %v1431, %v1432
  %v1434 = vrot.slane %v1433, 2
  %v1435 = vadd.f32 %v1433, %v1434
  %v1436 = vrot.slane %v1435, 1
  %v1437 = vadd.f32 %v1435, %v1436
  %v1438 = vlog2.pop %v1437
  %v1439 = vmul.f32 %v1438, 0.6931472
  %v1440 = vadd.f32 %v1412, %v1439
  %v1441 = vadd.f32 %v1403, %v1440
  %vm1442 = vcmp.gt.f32.partialorder %v1441, 20.0
  %v1443 = vmin.f32 %v1441, 20.0
  %v1444 = vmul.f32 %v1443, 1.442695
  %v1445 = vpow.pop %v1444
  %v1446 = vadd.f32 %v1445, 1.0
  %v1447 = vlog2.pop %v1446
  %v1448 = vmul.f32 %v1447, 0.6931472
  %v1449 = vmul.f32 -0.5, %v1445
  %v1450 = vadd.f32 %v1449, 1.0
  %v1451 = vmul.f32 %v1450, %v1445
  %v1452 = vand.u32 2147483647, %v1445
  %vm1453 = vcmp.lt.f32.partialorder %v1452, 0.0004427343
  %v1454 = vsel %vm1453, %v1451, %v1448
  %v1455 = vsel %vm1442, %v1441, %v1454
  %v1456 = vmul.f32 %v1455, 0.0625
  %v1457 = vmul.f32 %v1363, %v1150
  %v1458 = vmul.f32 %v1364, %v1151
  %v1459 = vmul.f32 %v1365, %v1152
  %v1460 = vmul.f32 %v1366, %v1153
  %v1461 = vsel %vm815, %v1457, 0.0
  %v1462 = vsel %vm815, %v1458, 0.0
  %v1463 = vadd.f32 %v1461, %v1462
  %v1464 = vsel %vm815, %v1459, 0.0
  %v1465 = vadd.f32 %v1463, %v1464
  %v1466 = vsel %vm815, %v1460, 0.0
  %v1467 = vadd.f32 %v1465, %v1466
  %1468 = vadd.xlane.f32.xlu0 %v1467
  %v1469 = vpop.xlane.xlu0 %1468
  %v1470 = vrot.slane %v1469, 4
  %v1471 = vadd.f32 %v1469, %v1470
  %v1472 = vrot.slane %v1471, 2
  %v1473 = vadd.f32 %v1471, %v1472
  %v1474 = vrot.slane %v1473, 1
  %v1475 = vadd.f32 %v1473, %v1474
  %s1476 = vtos %v1475
  %v1477 = vsel %vm815, %v1150, 0.0
  %v1478 = vsel %vm815, %v1151, 0.0
  %v1479 = vadd.f32 %v1477, %v1478
  %v1480 = vsel %vm815, %v1152, 0.0
  %v1481 = vadd.f32 %v1479, %v1480
  %v1482 = vsel %vm815, %v1153, 0.0
  %v1483 = vadd.f32 %v1481, %v1482
  %1484 = vadd.xlane.f32.xlu0 %v1483
  %v1485 = vpop.xlane.xlu0 %1484
  %v1486 = vrot.slane %v1485, 4
  %v1487 = vadd.f32 %v1485, %v1486
  %v1488 = vrot.slane %v1487, 2
  %v1489 = vadd.f32 %v1487, %v1488
  %v1490 = vrot.slane %v1489, 1
  %v1491 = vadd.f32 %v1489, %v1490
  %s1492 = vtos %v1491
  %s1493 = smax.f32 %s1492, 1.0
  %v1494 = vstv %s1493
  %v1495 = vrcp.pop %v1494
  %s1496 = vtos %v1495
  %s1497 = smul.f32 %s1476, %s1496
  %v1498 = vmul.f32 %v1456, %v1158
  %v1499 = vsel %vm832, %v1498, 0.0
  %1500 = vadd.xlane.f32.xlu0 %v1499
  %v1501 = vpop.xlane.xlu0 %1500
  %v1502 = vrot.slane %v1501, 4
  %v1503 = vadd.f32 %v1501, %v1502
  %v1504 = vrot.slane %v1503, 2
  %v1505 = vadd.f32 %v1503, %v1504
  %v1506 = vrot.slane %v1505, 1
  %v1507 = vadd.f32 %v1505, %v1506
  %s1508 = vtos %v1507
  %v1509 = vsel %vm832, %v1158, 0.0
  %1510 = vadd.xlane.f32.xlu0 %v1509
  %v1511 = vpop.xlane.xlu0 %1510
  %v1512 = vrot.slane %v1511, 4
  %v1513 = vadd.f32 %v1511, %v1512
  %v1514 = vrot.slane %v1513, 2
  %v1515 = vadd.f32 %v1513, %v1514
  %v1516 = vrot.slane %v1515, 1
  %v1517 = vadd.f32 %v1515, %v1516
  %s1518 = vtos %v1517
  %s1519 = smax.f32 %s1518, 1.0
  %v1520 = vstv %s1519
  %v1521 = vrcp.pop %v1520
  %s1522 = vtos %v1521
  %s1523 = smul.f32 %s1508, %s1522
  %s1524 = sadd.f32 %s1497, %s1523
  %s1525 = smul.f32 %s1524, 0.5
  %v1526 = vsel %vm1134, 1, 0
  %v1527 = vsel %vm1135, 1, 0
  %v1528 = vsel %vm1136, 1, 0
  %v1529 = vsel %vm1137, 1, 0
  %v1530 = vcvt.s32.f32 %v1526
  %v1531 = vcvt.s32.f32 %v1527
  %v1532 = vcvt.s32.f32 %v1528
  %v1533 = vcvt.s32.f32 %v1529
  %vm1534 = vcmp.lt.f32.partialorder %v760, 0.00140625
  %vm1535 = vcmp.lt.f32.partialorder %v763, 0.00140625
  %vm1536 = vcmp.lt.f32.partialorder %v766, 0.00140625
  %vm1537 = vcmp.lt.f32.partialorder %v769, 0.00140625
  %v1538 = vsel %vm1534, 1, 0
  %v1539 = vsel %vm1535, 1, 0
  %v1540 = vsel %vm1536, 1, 0
  %v1541 = vsel %vm1537, 1, 0
  %v1542 = vcvt.s32.f32 %v1538
  %v1543 = vcvt.s32.f32 %v1539
  %v1544 = vcvt.s32.f32 %v1540
  %v1545 = vcvt.s32.f32 %v1541
  %v1546 = vmul.f32 %v1542, %v1530
  %v1547 = vmul.f32 %v1543, %v1531
  %v1548 = vmul.f32 %v1544, %v1532
  %v1549 = vmul.f32 %v1545, %v1533
  %v1550 = vsel %vm815, %v1546, 0.0
  %v1551 = vsel %vm815, %v1547, 0.0
  %v1552 = vadd.f32 %v1550, %v1551
  %v1553 = vsel %vm815, %v1548, 0.0
  %v1554 = vadd.f32 %v1552, %v1553
  %v1555 = vsel %vm815, %v1549, 0.0
  %v1556 = vadd.f32 %v1554, %v1555
  %1557 = vadd.xlane.f32.xlu0 %v1556
  %v1558 = vpop.xlane.xlu0 %1557
  %v1559 = vrot.slane %v1558, 4
  %v1560 = vadd.f32 %v1558, %v1559
  %v1561 = vrot.slane %v1560, 2
  %v1562 = vadd.f32 %v1560, %v1561
  %v1563 = vrot.slane %v1562, 1
  %v1564 = vadd.f32 %v1562, %v1563
  %s1565 = vtos %v1564
  %v1566 = vsel %vm815, %v1530, 0.0
  %v1567 = vsel %vm815, %v1531, 0.0
  %v1568 = vadd.f32 %v1566, %v1567
  %v1569 = vsel %vm815, %v1532, 0.0
  %v1570 = vadd.f32 %v1568, %v1569
  %v1571 = vsel %vm815, %v1533, 0.0
  %v1572 = vadd.f32 %v1570, %v1571
  %1573 = vadd.xlane.f32.xlu0 %v1572
  %v1574 = vpop.xlane.xlu0 %1573
  %v1575 = vrot.slane %v1574, 4
  %v1576 = vadd.f32 %v1574, %v1575
  %v1577 = vrot.slane %v1576, 2
  %v1578 = vadd.f32 %v1576, %v1577
  %v1579 = vrot.slane %v1578, 1
  %v1580 = vadd.f32 %v1578, %v1579
  %s1581 = vtos %v1580
  %s1582 = sadd.f32 %s1581, 1e-12
  %v1583 = vstv %s1582
  %v1584 = vrcp.pop %v1583
  %s1585 = vtos %v1584
  %s1586 = smul.f32 %s1565, %s1585
  %vm1587 = vcmp.eq.s32.totalorder %v22, 0
  %v1588 = vstv %s412
  %v1589 = vsel %vm1587, %v1588, 0.0
  %vm1590 = vcmp.eq.s32.totalorder %v22, 1
  %v1591 = vstv %s498
  %v1592 = vsel %vm1590, %v1591, 0.0
  %v1593 = vadd.f32 %v1589, %v1592
  %vm1594 = vcmp.eq.s32.totalorder %v22, 2
  %v1595 = vstv %s503
  %v1596 = vsel %vm1594, %v1595, 0.0
  %v1597 = vadd.f32 %v1593, %v1596
  %vm1598 = vcmp.eq.s32.totalorder %v22, 3
  %v1599 = vstv %s969
  %v1600 = vsel %vm1598, %v1599, 0.0
  %v1601 = vadd.f32 %v1597, %v1600
  %vm1602 = vcmp.eq.s32.totalorder %v22, 4
  %v1603 = vstv %s1086
  %v1604 = vsel %vm1602, %v1603, 0.0
  %v1605 = vadd.f32 %v1601, %v1604
  %vm1606 = vcmp.eq.s32.totalorder %v22, 5
  %v1607 = vstv %s1091
  %v1608 = vsel %vm1606, %v1607, 0.0
  %v1609 = vadd.f32 %v1605, %v1608
  %vm1610 = vcmp.eq.s32.totalorder %v22, 6
  %v1611 = vstv %s1525
  %v1612 = vsel %vm1610, %v1611, 0.0
  %v1613 = vadd.f32 %v1609, %v1612
  %vm1614 = vcmp.eq.s32.totalorder %v22, 7
  %v1615 = vstv %s1586
  %v1616 = vsel %vm1614, %v1615, 0.0
  %v1617 = vadd.f32 %v1613, %v1616
  %vm1618 = vcmask 57344
  %1619 = vst.msk [vmem:[%s4] sm:$0x1] %vm1618, %v1617
  // Predicated region
  $region18: #{forward.1} parent=0 // pred_check
    _
  $region19: #{forward.1} parent=0 // pred_check_branch
    %1621 = sbr.rel (0) target = $region21
  $region20: #{forward.1} parent=0 // pred_region
    _
  $region21: #{forward.1} parent=0 // pred_fallthru
    _
  // Predicated region
  $region22: #{forward.1} parent=0 // pred_check
    _
  $region23: #{forward.1} parent=0 // pred_check_branch
    %1623 = sbr.rel (0) target = $region25
  $region24: #{forward.1} parent=0 // pred_region
    _
  $region25: #{forward.1} parent=0 // pred_fallthru
    _

</llo_original>
